<compile_context>
chip_gen: v7x
topology: tpu7x:2x2x1
jax: 0.10.0
libtpu: 0.0.40
codegen_flags: <defaults>
</compile_context>

<pallas_src>
import math

import jax
import jax.numpy as jnp
from jax.experimental import pallas as pl
from jax.experimental.pallas import tpu as pltpu  # noqa: F401  (kept for TPU-specific tuning hooks)

# ----------------------------- config -----------------------------
B = 2           # batch
S = 8           # seq_len
E = 32          # hidden_size (embedding_dim)
H = 4           # num_heads
DH = E // H     # per-head hidden size
F = 64          # feed_forward_hidden_size
BS = B * S      # folded batch*seq rows
EPS = 1e-6
GELU_C = math.sqrt(2.0 / math.pi)


# ----------------------------- kernel -----------------------------
def _layer_norm(v, g, b):
    # torch: g * (x - mean) / (std + eps) + b   with unbiased std (N-1)
    n = v.shape[-1]
    mean = jnp.mean(v, axis=-1, keepdims=True)
    d = v - mean
    var = jnp.sum(d * d, axis=-1, keepdims=True) * (1.0 / (n - 1))
    inv = pl.reciprocal(jnp.sqrt(var) + EPS)   # exact reciprocal -> multiply, no VPU divide
    return g * d * inv + b


def encoder_layer_kernel(
    x_ref, mbias_ref,
    wqkv_ref, bqkv_ref, wo_ref,
    wff_ref, bff_ref, wfo_ref,
    vecs_ref,
    out_ref,
):
    x = x_ref[...]                       # (BS, E)  batch folded into rows
    mbias = mbias_ref[...]               # (BS, BS) additive attention bias (mask + block-diag)
    vecs = vecs_ref[...]                 # (6, E): [bo, g1, b1, bfo, g2, b2]
    bo, g1, b1 = vecs[0:1], vecs[1:2], vecs[2:3]
    bfo, g2, b2 = vecs[3:4], vecs[4:5], vecs[5:6]

    # ---- fused QKV projection: one MXU push ----
    qkv = jnp.dot(x, wqkv_ref[...], preferred_element_type=jnp.float32) + bqkv_ref[...]

    wo = wo_ref[...]                     # (E, E)
    # Fold the 1/sqrt(head_dim) attention scale into Q once (one (BS,E) mul
    # instead of H score-matrix muls).
    q_all = qkv[:, :E] * (1.0 / math.sqrt(DH))

    # ---- per-head attention, accumulated through wo (no concat, no explicit .T) ----
    attn = jnp.broadcast_to(bo, (BS, E))         # seed accumulator with output-proj bias
    for h in range(H):
        lo = h * DH
        qh = q_all[:, lo:lo + DH]                        # (BS, DH), pre-scaled
        kh = qkv[:, E + lo:E + lo + DH]                  # (BS, DH)
        vh = qkv[:, 2 * E + lo:2 * E + lo + DH]          # (BS, DH)
        # q @ k^T expressed as a contraction on the last dim of both operands.
        s = jax.lax.dot_general(qh, kh, (((1,), (1,)), ((), ())),
                                preferred_element_type=jnp.float32)   # (BS, BS)
        s = s + mbias
        s = s - jnp.max(s, axis=-1, keepdims=True)
        p = jnp.exp(s)
        p = p * pl.reciprocal(jnp.sum(p, axis=-1, keepdims=True))
        ctx = jnp.dot(p, vh, preferred_element_type=jnp.float32)      # (BS, DH)
        attn = attn + jnp.dot(ctx, wo[lo:lo + DH, :],                  # sublane slice of wo
                              preferred_element_type=jnp.float32)      # (BS, E)

    # ---- add & norm #1 ----
    h1 = _layer_norm(x + attn, g1, b1)

    # ---- feed forward with tanh-approx GELU ----
    ff = jnp.dot(h1, wff_ref[...], preferred_element_type=jnp.float32) + bff_ref[...]
    cdf = 0.5 * (1.0 + jnp.tanh(GELU_C * (ff + 0.044715 * ff * ff * ff)))
    ff = ff * cdf
    ff = jnp.dot(ff, wfo_ref[...], preferred_element_type=jnp.float32) + bfo

    # ---- add & norm #2 ----
    out_ref[...] = _layer_norm(h1 + ff, g2, b2)


# ----------------------------- wrapper -----------------------------
def encoder_layer(x, mask, params):
    """x: (B, S, E) f32, mask: (B, S) f32 (0 => masked key)."""
    # Pack parameters (tiny concats; fuse away under jit).
    wqkv = jnp.concatenate([params["wq"], params["wk"], params["wv"]], axis=1)   # (E, 3E)
    bqkv = jnp.concatenate([params["bq"], params["bk"], params["bv"]], axis=1)   # (1, 3E)
    vecs = jnp.concatenate([params["bo"], params["g1"], params["b1"],
                            params["bfo"], params["g2"], params["b2"]], axis=0)  # (6, E)

    # Fold batch into rows; attention stays batch-local via a block-diagonal
    # additive bias that also carries the key-padding mask (built once here,
    # instead of a compare+select per head inside the kernel).
    x2 = x.reshape(BS, E)
    bid = jnp.arange(BS, dtype=jnp.int32) // S
    same_batch = bid[:, None] == bid[None, :]
    key_ok = (mask.reshape(BS) != 0.0)[None, :]
    mbias = jnp.where(same_batch & key_ok, 0.0, -1e9).astype(jnp.float32)        # (BS, BS)

    out = pl.pallas_call(
        encoder_layer_kernel,
        out_shape=jax.ShapeDtypeStruct((BS, E), jnp.float32),
    )(x2, mbias, wqkv, bqkv, params["wo"],
      params["wff"], params["bff"], params["wfo"], vecs)
    return out.reshape(B, S, E)


# ----------------------------- reference (pure JAX) -----------------------------
def encoder_layer_ref(x, mask, p):
    def ln(v, g, b):
        n = v.shape[-1]
        mean = jnp.mean(v, axis=-1, keepdims=True)
        var = jnp.sum((v - mean) ** 2, axis=-1, keepdims=True) / (n - 1)
        return g * (v - mean) / (jnp.sqrt(var) + EPS) + b

    q = x @ p["wq"] + p["bq"]
    k = x @ p["wk"] + p["bk"]
    v = x @ p["wv"] + p["bv"]

    def split(t):  # (B,S,E) -> (B,H,S,DH)
        return t.reshape(B, S, H, DH).transpose(0, 2, 1, 3)

    qh, kh, vh = split(q), split(k), split(v)
    scores = jnp.einsum("bhqd,bhkd->bhqk", qh, kh) / math.sqrt(DH)
    m = mask[:, None, None, :]                      # (B,1,1,S) over key dim
    scores = jnp.where(m == 0.0, -1e9, scores)
    attn = jax.nn.softmax(scores, axis=-1)
    ctx = jnp.einsum("bhqk,bhkd->bhqd", attn, vh)
    ctx = ctx.transpose(0, 2, 1, 3).reshape(B, S, E)
    ctx = ctx @ p["wo"] + p["bo"]

    h1 = ln(x + ctx, p["g1"], p["b1"])
    ff = h1 @ p["wff"] + p["bff"]
    ff = ff * 0.5 * (1.0 + jnp.tanh(GELU_C * (ff + 0.044715 * ff ** 3)))
    ff = ff @ p["wfo"] + p["bfo"]
    return ln(h1 + ff, p["g2"], p["b2"])


# ----------------------------- main -----------------------------
if __name__ == "__main__":
    key = jax.random.PRNGKey(0)
    keys = jax.random.split(key, 10)

    # Deterministic synthetic parameters (weights stored as (in, out)).
    params = {
        "wq": 0.1 * jax.random.normal(keys[0], (E, E), jnp.float32),
        "bq": 0.01 * jax.random.normal(keys[1], (1, E), jnp.float32),
        "wk": 0.1 * jax.random.normal(keys[2], (E, E), jnp.float32),
        "bk": 0.01 * jax.random.normal(keys[3], (1, E), jnp.float32),
        "wv": 0.1 * jax.random.normal(keys[4], (E, E), jnp.float32),
        "bv": 0.01 * jax.random.normal(keys[5], (1, E), jnp.float32),
        "wo": 0.1 * jax.random.normal(keys[6], (E, E), jnp.float32),
        "bo": 0.01 * jax.random.normal(keys[7], (1, E), jnp.float32),
        "g1": jnp.ones((1, E), jnp.float32),
        "b1": jnp.zeros((1, E), jnp.float32),
        "wff": 0.1 * jax.random.normal(keys[8], (E, F), jnp.float32),
        "bff": jnp.zeros((1, F), jnp.float32),
        "wfo": 0.1 * jax.random.normal(keys[9], (F, E), jnp.float32),
        "bfo": jnp.zeros((1, E), jnp.float32),
        "g2": jnp.ones((1, E), jnp.float32),
        "b2": jnp.zeros((1, E), jnp.float32),
    }

    xkey, mkey = jax.random.split(jax.random.PRNGKey(1))
    x = jax.random.normal(xkey, (B, S, E), jnp.float32)
    # mask: last two positions of batch 1 are masked out (0 = masked key)
    mask = jnp.ones((B, S), jnp.float32).at[1, -2:].set(0.0)

    out = jax.jit(encoder_layer)(x, mask, params)
    out = jax.block_until_ready(out)

    ref = encoder_layer_ref(x, mask, params)
    assert out.shape == (B, S, E)
    assert jnp.allclose(out, ref, atol=1e-4, rtol=1e-4), (
        f"max abs err = {jnp.max(jnp.abs(out - ref))}")

    print("KERNEL_OK")
</pallas_src>

<mosaic_0001>
module attributes {stable_mosaic.version = 11 : i64} {
  func.func @encoder_layer_kernel(%arg0: memref<16x32xf32, #tpu.memory_space<vmem>>, %arg1: memref<16x16xf32, #tpu.memory_space<vmem>>, %arg2: memref<32x96xf32, #tpu.memory_space<vmem>>, %arg3: memref<1x96xf32, #tpu.memory_space<vmem>>, %arg4: memref<32x32xf32, #tpu.memory_space<vmem>>, %arg5: memref<32x64xf32, #tpu.memory_space<vmem>>, %arg6: memref<1x64xf32, #tpu.memory_space<vmem>>, %arg7: memref<64x32xf32, #tpu.memory_space<vmem>>, %arg8: memref<6x32xf32, #tpu.memory_space<vmem>>, %arg9: memref<16x32xf32, #tpu.memory_space<vmem>>) attributes {dimension_semantics = [], scalar_prefetch = 0 : i64, scratch_operands = 0 : i64, tpu.core_type = #tpu.core_type<tc>} {
    %c0 = arith.constant 0 : index
    %c0_0 = arith.constant 0 : index
    %0 = vector.load %arg0[%c0, %c0_0] : memref<16x32xf32, #tpu.memory_space<vmem>>, vector<16x32xf32>
    %c0_1 = arith.constant 0 : index
    %c0_2 = arith.constant 0 : index
    %1 = vector.load %arg1[%c0_1, %c0_2] : memref<16x16xf32, #tpu.memory_space<vmem>>, vector<16x16xf32>
    %c0_3 = arith.constant 0 : index
    %c0_4 = arith.constant 0 : index
    %2 = vector.load %arg8[%c0_3, %c0_4] : memref<6x32xf32, #tpu.memory_space<vmem>>, vector<6x32xf32>
    %3 = vector.extract_strided_slice %2 {offsets = [0, 0], sizes = [1, 32], strides = [1, 1]} : vector<6x32xf32> to vector<1x32xf32>
    %4 = vector.extract_strided_slice %2 {offsets = [1, 0], sizes = [1, 32], strides = [1, 1]} : vector<6x32xf32> to vector<1x32xf32>
    %5 = vector.extract_strided_slice %2 {offsets = [2, 0], sizes = [1, 32], strides = [1, 1]} : vector<6x32xf32> to vector<1x32xf32>
    %6 = vector.extract_strided_slice %2 {offsets = [3, 0], sizes = [1, 32], strides = [1, 1]} : vector<6x32xf32> to vector<1x32xf32>
    %7 = vector.extract_strided_slice %2 {offsets = [4, 0], sizes = [1, 32], strides = [1, 1]} : vector<6x32xf32> to vector<1x32xf32>
    %8 = vector.extract_strided_slice %2 {offsets = [5, 0], sizes = [1, 32], strides = [1, 1]} : vector<6x32xf32> to vector<1x32xf32>
    %c0_5 = arith.constant 0 : index
    %c0_6 = arith.constant 0 : index
    %9 = vector.load %arg2[%c0_5, %c0_6] : memref<32x96xf32, #tpu.memory_space<vmem>>, vector<32x96xf32>
    %cst = arith.constant dense<0.000000e+00> : vector<16x96xf32>
    %10 = tpu.matmul %0, %9, %cst {dimension_numbers = #tpu.dot_dimension_numbers<[1], [0], [0], [1], [0, 0, 1, 1], [], []>} : vector<16x32xf32>, vector<32x96xf32>, vector<16x96xf32> -> vector<16x96xf32>
    %c0_7 = arith.constant 0 : index
    %c0_8 = arith.constant 0 : index
    %11 = vector.load %arg3[%c0_7, %c0_8] : memref<1x96xf32, #tpu.memory_space<vmem>>, vector<1x96xf32>
    %12 = vector.broadcast %11 : vector<1x96xf32> to vector<16x96xf32>
    %13 = arith.addf %10, %12 : vector<16x96xf32>
    %c0_9 = arith.constant 0 : index
    %c0_10 = arith.constant 0 : index
    %14 = vector.load %arg4[%c0_9, %c0_10] : memref<32x32xf32, #tpu.memory_space<vmem>>, vector<32x32xf32>
    %15 = vector.extract_strided_slice %13 {offsets = [0, 0], sizes = [16, 32], strides = [1, 1]} : vector<16x96xf32> to vector<16x32xf32>
    %cst_11 = arith.constant 0.353553385 : f32
    %16 = vector.broadcast %cst_11 : f32 to vector<16x32xf32>
    %17 = arith.mulf %15, %16 : vector<16x32xf32>
    %18 = vector.shape_cast %3 : vector<1x32xf32> to vector<1x32xf32>
    %19 = vector.broadcast %18 : vector<1x32xf32> to vector<16x32xf32>
    %20 = vector.extract_strided_slice %17 {offsets = [0, 0], sizes = [16, 8], strides = [1, 1]} : vector<16x32xf32> to vector<16x8xf32>
    %21 = vector.extract_strided_slice %13 {offsets = [0, 32], sizes = [16, 8], strides = [1, 1]} : vector<16x96xf32> to vector<16x8xf32>
    %22 = vector.extract_strided_slice %13 {offsets = [0, 64], sizes = [16, 8], strides = [1, 1]} : vector<16x96xf32> to vector<16x8xf32>
    %cst_12 = arith.constant dense<0.000000e+00> : vector<16x16xf32>
    %23 = tpu.matmul %20, %21, %cst_12 {dimension_numbers = #tpu.dot_dimension_numbers<[1], [1], [0], [0], [0, 0, 1, 0], [], []>} : vector<16x8xf32>, vector<16x8xf32>, vector<16x16xf32> -> vector<16x16xf32>
    %24 = arith.addf %23, %1 : vector<16x16xf32>
    %cst_13 = arith.constant dense<0xFF800000> : vector<16xf32>
    %25 = vector.multi_reduction <maximumf>, %24, %cst_13 [1] : vector<16x16xf32> to vector<16xf32>
    %26 = vector.shape_cast %25 : vector<16xf32> to vector<16x1xf32>
    %27 = vector.broadcast %26 : vector<16x1xf32> to vector<16x16xf32>
    %28 = arith.subf %24, %27 : vector<16x16xf32>
    %29 = math.exp %28 : vector<16x16xf32>
    %cst_14 = arith.constant dense<0.000000e+00> : vector<16xf32>
    %30 = vector.multi_reduction <add>, %29, %cst_14 [1] : vector<16x16xf32> to vector<16xf32>
    %31 = vector.shape_cast %30 : vector<16xf32> to vector<16x1xf32>
    %32 = tpu.reciprocal %31 : vector<16x1xf32> -> vector<16x1xf32>
    %33 = vector.broadcast %32 : vector<16x1xf32> to vector<16x16xf32>
    %34 = arith.mulf %29, %33 : vector<16x16xf32>
    %cst_15 = arith.constant dense<0.000000e+00> : vector<16x8xf32>
    %35 = tpu.matmul %34, %22, %cst_15 {dimension_numbers = #tpu.dot_dimension_numbers<[1], [0], [0], [1], [0, 0, 1, 1], [], []>} : vector<16x16xf32>, vector<16x8xf32>, vector<16x8xf32> -> vector<16x8xf32>
    %36 = vector.extract_strided_slice %14 {offsets = [0, 0], sizes = [8, 32], strides = [1, 1]} : vector<32x32xf32> to vector<8x32xf32>
    %cst_16 = arith.constant dense<0.000000e+00> : vector<16x32xf32>
    %37 = tpu.matmul %35, %36, %cst_16 {dimension_numbers = #tpu.dot_dimension_numbers<[1], [0], [0], [1], [0, 0, 1, 1], [], []>} : vector<16x8xf32>, vector<8x32xf32>, vector<16x32xf32> -> vector<16x32xf32>
    %38 = arith.addf %19, %37 : vector<16x32xf32>
    %39 = vector.extract_strided_slice %17 {offsets = [0, 8], sizes = [16, 8], strides = [1, 1]} : vector<16x32xf32> to vector<16x8xf32>
    %40 = vector.extract_strided_slice %13 {offsets = [0, 40], sizes = [16, 8], strides = [1, 1]} : vector<16x96xf32> to vector<16x8xf32>
    %41 = vector.extract_strided_slice %13 {offsets = [0, 72], sizes = [16, 8], strides = [1, 1]} : vector<16x96xf32> to vector<16x8xf32>
    %cst_17 = arith.constant dense<0.000000e+00> : vector<16x16xf32>
    %42 = tpu.matmul %39, %40, %cst_17 {dimension_numbers = #tpu.dot_dimension_numbers<[1], [1], [0], [0], [0, 0, 1, 0], [], []>} : vector<16x8xf32>, vector<16x8xf32>, vector<16x16xf32> -> vector<16x16xf32>
    %43 = arith.addf %42, %1 : vector<16x16xf32>
    %cst_18 = arith.constant dense<0xFF800000> : vector<16xf32>
    %44 = vector.multi_reduction <maximumf>, %43, %cst_18 [1] : vector<16x16xf32> to vector<16xf32>
    %45 = vector.shape_cast %44 : vector<16xf32> to vector<16x1xf32>
    %46 = vector.broadcast %45 : vector<16x1xf32> to vector<16x16xf32>
    %47 = arith.subf %43, %46 : vector<16x16xf32>
    %48 = math.exp %47 : vector<16x16xf32>
    %cst_19 = arith.constant dense<0.000000e+00> : vector<16xf32>
    %49 = vector.multi_reduction <add>, %48, %cst_19 [1] : vector<16x16xf32> to vector<16xf32>
    %50 = vector.shape_cast %49 : vector<16xf32> to vector<16x1xf32>
    %51 = tpu.reciprocal %50 : vector<16x1xf32> -> vector<16x1xf32>
    %52 = vector.broadcast %51 : vector<16x1xf32> to vector<16x16xf32>
    %53 = arith.mulf %48, %52 : vector<16x16xf32>
    %cst_20 = arith.constant dense<0.000000e+00> : vector<16x8xf32>
    %54 = tpu.matmul %53, %41, %cst_20 {dimension_numbers = #tpu.dot_dimension_numbers<[1], [0], [0], [1], [0, 0, 1, 1], [], []>} : vector<16x16xf32>, vector<16x8xf32>, vector<16x8xf32> -> vector<16x8xf32>
    %55 = vector.extract_strided_slice %14 {offsets = [8, 0], sizes = [8, 32], strides = [1, 1]} : vector<32x32xf32> to vector<8x32xf32>
    %cst_21 = arith.constant dense<0.000000e+00> : vector<16x32xf32>
    %56 = tpu.matmul %54, %55, %cst_21 {dimension_numbers = #tpu.dot_dimension_numbers<[1], [0], [0], [1], [0, 0, 1, 1], [], []>} : vector<16x8xf32>, vector<8x32xf32>, vector<16x32xf32> -> vector<16x32xf32>
    %57 = arith.addf %38, %56 : vector<16x32xf32>
    %58 = vector.extract_strided_slice %17 {offsets = [0, 16], sizes = [16, 8], strides = [1, 1]} : vector<16x32xf32> to vector<16x8xf32>
    %59 = vector.extract_strided_slice %13 {offsets = [0, 48], sizes = [16, 8], strides = [1, 1]} : vector<16x96xf32> to vector<16x8xf32>
    %60 = vector.extract_strided_slice %13 {offsets = [0, 80], sizes = [16, 8], strides = [1, 1]} : vector<16x96xf32> to vector<16x8xf32>
    %cst_22 = arith.constant dense<0.000000e+00> : vector<16x16xf32>
    %61 = tpu.matmul %58, %59, %cst_22 {dimension_numbers = #tpu.dot_dimension_numbers<[1], [1], [0], [0], [0, 0, 1, 0], [], []>} : vector<16x8xf32>, vector<16x8xf32>, vector<16x16xf32> -> vector<16x16xf32>
    %62 = arith.addf %61, %1 : vector<16x16xf32>
    %cst_23 = arith.constant dense<0xFF800000> : vector<16xf32>
    %63 = vector.multi_reduction <maximumf>, %62, %cst_23 [1] : vector<16x16xf32> to vector<16xf32>
    %64 = vector.shape_cast %63 : vector<16xf32> to vector<16x1xf32>
    %65 = vector.broadcast %64 : vector<16x1xf32> to vector<16x16xf32>
    %66 = arith.subf %62, %65 : vector<16x16xf32>
    %67 = math.exp %66 : vector<16x16xf32>
    %cst_24 = arith.constant dense<0.000000e+00> : vector<16xf32>
    %68 = vector.multi_reduction <add>, %67, %cst_24 [1] : vector<16x16xf32> to vector<16xf32>
    %69 = vector.shape_cast %68 : vector<16xf32> to vector<16x1xf32>
    %70 = tpu.reciprocal %69 : vector<16x1xf32> -> vector<16x1xf32>
    %71 = vector.broadcast %70 : vector<16x1xf32> to vector<16x16xf32>
    %72 = arith.mulf %67, %71 : vector<16x16xf32>
    %cst_25 = arith.constant dense<0.000000e+00> : vector<16x8xf32>
    %73 = tpu.matmul %72, %60, %cst_25 {dimension_numbers = #tpu.dot_dimension_numbers<[1], [0], [0], [1], [0, 0, 1, 1], [], []>} : vector<16x16xf32>, vector<16x8xf32>, vector<16x8xf32> -> vector<16x8xf32>
    %74 = vector.extract_strided_slice %14 {offsets = [16, 0], sizes = [8, 32], strides = [1, 1]} : vector<32x32xf32> to vector<8x32xf32>
    %cst_26 = arith.constant dense<0.000000e+00> : vector<16x32xf32>
    %75 = tpu.matmul %73, %74, %cst_26 {dimension_numbers = #tpu.dot_dimension_numbers<[1], [0], [0], [1], [0, 0, 1, 1], [], []>} : vector<16x8xf32>, vector<8x32xf32>, vector<16x32xf32> -> vector<16x32xf32>
    %76 = arith.addf %57, %75 : vector<16x32xf32>
    %77 = vector.extract_strided_slice %17 {offsets = [0, 24], sizes = [16, 8], strides = [1, 1]} : vector<16x32xf32> to vector<16x8xf32>
    %78 = vector.extract_strided_slice %13 {offsets = [0, 56], sizes = [16, 8], strides = [1, 1]} : vector<16x96xf32> to vector<16x8xf32>
    %79 = vector.extract_strided_slice %13 {offsets = [0, 88], sizes = [16, 8], strides = [1, 1]} : vector<16x96xf32> to vector<16x8xf32>
    %cst_27 = arith.constant dense<0.000000e+00> : vector<16x16xf32>
    %80 = tpu.matmul %77, %78, %cst_27 {dimension_numbers = #tpu.dot_dimension_numbers<[1], [1], [0], [0], [0, 0, 1, 0], [], []>} : vector<16x8xf32>, vector<16x8xf32>, vector<16x16xf32> -> vector<16x16xf32>
    %81 = arith.addf %80, %1 : vector<16x16xf32>
    %cst_28 = arith.constant dense<0xFF800000> : vector<16xf32>
    %82 = vector.multi_reduction <maximumf>, %81, %cst_28 [1] : vector<16x16xf32> to vector<16xf32>
    %83 = vector.shape_cast %82 : vector<16xf32> to vector<16x1xf32>
    %84 = vector.broadcast %83 : vector<16x1xf32> to vector<16x16xf32>
    %85 = arith.subf %81, %84 : vector<16x16xf32>
    %86 = math.exp %85 : vector<16x16xf32>
    %cst_29 = arith.constant dense<0.000000e+00> : vector<16xf32>
    %87 = vector.multi_reduction <add>, %86, %cst_29 [1] : vector<16x16xf32> to vector<16xf32>
    %88 = vector.shape_cast %87 : vector<16xf32> to vector<16x1xf32>
    %89 = tpu.reciprocal %88 : vector<16x1xf32> -> vector<16x1xf32>
    %90 = vector.broadcast %89 : vector<16x1xf32> to vector<16x16xf32>
    %91 = arith.mulf %86, %90 : vector<16x16xf32>
    %cst_30 = arith.constant dense<0.000000e+00> : vector<16x8xf32>
    %92 = tpu.matmul %91, %79, %cst_30 {dimension_numbers = #tpu.dot_dimension_numbers<[1], [0], [0], [1], [0, 0, 1, 1], [], []>} : vector<16x16xf32>, vector<16x8xf32>, vector<16x8xf32> -> vector<16x8xf32>
    %93 = vector.extract_strided_slice %14 {offsets = [24, 0], sizes = [8, 32], strides = [1, 1]} : vector<32x32xf32> to vector<8x32xf32>
    %cst_31 = arith.constant dense<0.000000e+00> : vector<16x32xf32>
    %94 = tpu.matmul %92, %93, %cst_31 {dimension_numbers = #tpu.dot_dimension_numbers<[1], [0], [0], [1], [0, 0, 1, 1], [], []>} : vector<16x8xf32>, vector<8x32xf32>, vector<16x32xf32> -> vector<16x32xf32>
    %95 = arith.addf %76, %94 : vector<16x32xf32>
    %96 = arith.addf %0, %95 : vector<16x32xf32>
    %cst_32 = arith.constant dense<0.000000e+00> : vector<16xf32>
    %97 = vector.multi_reduction <add>, %96, %cst_32 [1] : vector<16x32xf32> to vector<16xf32>
    %98 = vector.shape_cast %97 : vector<16xf32> to vector<16x1xf32>
    %cst_33 = arith.constant 3.200000e+01 : f32
    %99 = vector.broadcast %cst_33 : f32 to vector<16x1xf32>
    %100 = arith.divf %98, %99 : vector<16x1xf32>
    %101 = vector.broadcast %100 : vector<16x1xf32> to vector<16x32xf32>
    %102 = arith.subf %96, %101 : vector<16x32xf32>
    %103 = arith.mulf %102, %102 : vector<16x32xf32>
    %cst_34 = arith.constant dense<0.000000e+00> : vector<16xf32>
    %104 = vector.multi_reduction <add>, %103, %cst_34 [1] : vector<16x32xf32> to vector<16xf32>
    %105 = vector.shape_cast %104 : vector<16xf32> to vector<16x1xf32>
    %cst_35 = arith.constant 0.0322580636 : f32
    %106 = vector.broadcast %cst_35 : f32 to vector<16x1xf32>
    %107 = arith.mulf %105, %106 : vector<16x1xf32>
    %108 = math.sqrt %107 : vector<16x1xf32>
    %cst_36 = arith.constant 9.99999997E-7 : f32
    %109 = vector.broadcast %cst_36 : f32 to vector<16x1xf32>
    %110 = arith.addf %108, %109 : vector<16x1xf32>
    %111 = tpu.reciprocal %110 : vector<16x1xf32> -> vector<16x1xf32>
    %112 = vector.broadcast %4 : vector<1x32xf32> to vector<16x32xf32>
    %113 = arith.mulf %112, %102 : vector<16x32xf32>
    %114 = vector.broadcast %111 : vector<16x1xf32> to vector<16x32xf32>
    %115 = arith.mulf %113, %114 : vector<16x32xf32>
    %116 = vector.broadcast %5 : vector<1x32xf32> to vector<16x32xf32>
    %117 = arith.addf %115, %116 : vector<16x32xf32>
    %c0_37 = arith.constant 0 : index
    %c0_38 = arith.constant 0 : index
    %118 = vector.load %arg5[%c0_37, %c0_38] : memref<32x64xf32, #tpu.memory_space<vmem>>, vector<32x64xf32>
    %cst_39 = arith.constant dense<0.000000e+00> : vector<16x64xf32>
    %119 = tpu.matmul %117, %118, %cst_39 {dimension_numbers = #tpu.dot_dimension_numbers<[1], [0], [0], [1], [0, 0, 1, 1], [], []>} : vector<16x32xf32>, vector<32x64xf32>, vector<16x64xf32> -> vector<16x64xf32>
    %c0_40 = arith.constant 0 : index
    %c0_41 = arith.constant 0 : index
    %120 = vector.load %arg6[%c0_40, %c0_41] : memref<1x64xf32, #tpu.memory_space<vmem>>, vector<1x64xf32>
    %121 = vector.broadcast %120 : vector<1x64xf32> to vector<16x64xf32>
    %122 = arith.addf %119, %121 : vector<16x64xf32>
    %cst_42 = arith.constant 4.471500e-02 : f32
    %123 = vector.broadcast %cst_42 : f32 to vector<16x64xf32>
    %124 = arith.mulf %123, %122 : vector<16x64xf32>
    %125 = arith.mulf %124, %122 : vector<16x64xf32>
    %126 = arith.mulf %125, %122 : vector<16x64xf32>
    %127 = arith.addf %122, %126 : vector<16x64xf32>
    %cst_43 = arith.constant 0.797884583 : f32
    %128 = vector.broadcast %cst_43 : f32 to vector<16x64xf32>
    %129 = arith.mulf %128, %127 : vector<16x64xf32>
    %130 = math.tanh %129 : vector<16x64xf32>
    %cst_44 = arith.constant 1.000000e+00 : f32
    %131 = vector.broadcast %cst_44 : f32 to vector<16x64xf32>
    %132 = arith.addf %131, %130 : vector<16x64xf32>
    %cst_45 = arith.constant 5.000000e-01 : f32
    %133 = vector.broadcast %cst_45 : f32 to vector<16x64xf32>
    %134 = arith.mulf %133, %132 : vector<16x64xf32>
    %135 = arith.mulf %122, %134 : vector<16x64xf32>
    %c0_46 = arith.constant 0 : index
    %c0_47 = arith.constant 0 : index
    %136 = vector.load %arg7[%c0_46, %c0_47] : memref<64x32xf32, #tpu.memory_space<vmem>>, vector<64x32xf32>
    %cst_48 = arith.constant dense<0.000000e+00> : vector<16x32xf32>
    %137 = tpu.matmul %135, %136, %cst_48 {dimension_numbers = #tpu.dot_dimension_numbers<[1], [0], [0], [1], [0, 0, 1, 1], [], []>} : vector<16x64xf32>, vector<64x32xf32>, vector<16x32xf32> -> vector<16x32xf32>
    %138 = vector.broadcast %6 : vector<1x32xf32> to vector<16x32xf32>
    %139 = arith.addf %137, %138 : vector<16x32xf32>
    %140 = arith.addf %117, %139 : vector<16x32xf32>
    %cst_49 = arith.constant dense<0.000000e+00> : vector<16xf32>
    %141 = vector.multi_reduction <add>, %140, %cst_49 [1] : vector<16x32xf32> to vector<16xf32>
    %142 = vector.shape_cast %141 : vector<16xf32> to vector<16x1xf32>
    %cst_50 = arith.constant 3.200000e+01 : f32
    %143 = vector.broadcast %cst_50 : f32 to vector<16x1xf32>
    %144 = arith.divf %142, %143 : vector<16x1xf32>
    %145 = vector.broadcast %144 : vector<16x1xf32> to vector<16x32xf32>
    %146 = arith.subf %140, %145 : vector<16x32xf32>
    %147 = arith.mulf %146, %146 : vector<16x32xf32>
    %cst_51 = arith.constant dense<0.000000e+00> : vector<16xf32>
    %148 = vector.multi_reduction <add>, %147, %cst_51 [1] : vector<16x32xf32> to vector<16xf32>
    %149 = vector.shape_cast %148 : vector<16xf32> to vector<16x1xf32>
    %cst_52 = arith.constant 0.0322580636 : f32
    %150 = vector.broadcast %cst_52 : f32 to vector<16x1xf32>
    %151 = arith.mulf %149, %150 : vector<16x1xf32>
    %152 = math.sqrt %151 : vector<16x1xf32>
    %cst_53 = arith.constant 9.99999997E-7 : f32
    %153 = vector.broadcast %cst_53 : f32 to vector<16x1xf32>
    %154 = arith.addf %152, %153 : vector<16x1xf32>
    %155 = tpu.reciprocal %154 : vector<16x1xf32> -> vector<16x1xf32>
    %156 = vector.broadcast %7 : vector<1x32xf32> to vector<16x32xf32>
    %157 = arith.mulf %156, %146 : vector<16x32xf32>
    %158 = vector.broadcast %155 : vector<16x1xf32> to vector<16x32xf32>
    %159 = arith.mulf %157, %158 : vector<16x32xf32>
    %160 = vector.broadcast %8 : vector<1x32xf32> to vector<16x32xf32>
    %161 = arith.addf %159, %160 : vector<16x32xf32>
    %c0_54 = arith.constant 0 : index
    %c0_55 = arith.constant 0 : index
    %162 = vector.load %arg9[%c0_54, %c0_55] : memref<16x32xf32, #tpu.memory_space<vmem>>, vector<16x32xf32>
    tpu.vector_store %arg9[%c0_54, %c0_55], %161 {strides = array<i32>} : memref<16x32xf32, #tpu.memory_space<vmem>>, vector<16x32xf32>,
    return
  }
}

</mosaic_0001>

<llo_original>
// kernel: encoder_layer.1
$region0: #{encoder_layer.1}
  #allocation0 [shape = 'u32[]', space=smem, size = 0x4, offset = 0x4, fixed_abs, tag = 'smem constant byte address 0x4 - core index']
  #allocation1 [shape = 'u32[144,128]{1,0:T(1,128)}', space=vmem, size = 0x12000, scoped, tag = 'internal scratch']
  %s0 = inlined_call_operand.vmem [shape: f32[16,32], index: 0, kind: input, shape index: {}]
  %s1 = inlined_call_operand.vmem [shape: f32[16,16], index: 1, kind: input, shape index: {}]
  %s2 = inlined_call_operand.vmem [shape: f32[32,96], index: 2, kind: input, shape index: {}]
  %s3 = inlined_call_operand.vmem [shape: f32[1,96], index: 3, kind: input, shape index: {}]
  %s4 = inlined_call_operand.vmem [shape: f32[32,32], index: 4, kind: input, shape index: {}]
  %s5 = inlined_call_operand.vmem [shape: f32[32,64], index: 5, kind: input, shape index: {}]
  %s6 = inlined_call_operand.vmem [shape: f32[1,64], index: 6, kind: input, shape index: {}]
  %s7 = inlined_call_operand.vmem [shape: f32[64,32], index: 7, kind: input, shape index: {}]
  %s8 = inlined_call_operand.vmem [shape: f32[6,32], index: 8, kind: input, shape index: {}]
  %s9 = inlined_call_operand.hbm [shape: f32[16,32], index: 9, kind: output, shape index: {}]
  %s10 = sld [smem:[#allocation0]]
  $region46: #{encoder_layer.1} parent=0
    _
  %s12 = ssub.s32 1, %s10
  %s13 = scalar_select 0, %s12, %s10
  $region1: #{encoder_layer.1} parent=0
    #allocation2 [shape = 'u8[8192]{0}', space=vmem, size = 0x2000, scoped, tag = 'output window, operand 0, single buffered']
    #allocation3 [shape = 's32[1]{0}', space=sflag, size = 0x4, scoped, tag = 'scoped memory for encoder_layer.1']
    %14 = vsyncpa [#allocation3], 0
    // Predicated region
    $region2: #{encoder_layer.1} parent=1 // pred_check
      _
    $region3: #{encoder_layer.1} parent=1 // pred_check_branch
      %16 = sbr.rel (0) target = $region5
    $region4: #{encoder_layer.1} parent=1 // pred_region
      _
    $region5: #{encoder_layer.1} parent=1 // pred_fallthru
      _
    // Predicated region
    $region6: #{encoder_layer.1} parent=1 // pred_check
      _
    $region7: #{encoder_layer.1} parent=1 // pred_check_branch
      %18 = sbr.rel (0) target = $region9
    $region8: #{encoder_layer.1} parent=1 // pred_region
      _
    $region9: #{encoder_layer.1} parent=1 // pred_fallthru
      _
    // Predicated region
    $region10: #{encoder_layer.1} parent=1 // pred_check
      _
    $region11: #{encoder_layer.1} parent=1 // pred_check_branch
      %20 = sbr.rel (0) target = $region13
    $region12: #{encoder_layer.1} parent=1 // pred_region
      _
    $region13: #{encoder_layer.1} parent=1 // pred_fallthru
      _
    // Predicated region
    $region14: #{encoder_layer.1} parent=1 // pred_check
      _
    $region15: #{encoder_layer.1} parent=1 // pred_check_branch
      %22 = sbr.rel (0) target = $region17
    $region16: #{encoder_layer.1} parent=1 // pred_region
      _
    $region17: #{encoder_layer.1} parent=1 // pred_fallthru
      _
    // Predicated region
    $region18: #{encoder_layer.1} parent=1 // pred_check
      _
    $region19: #{encoder_layer.1} parent=1 // pred_check_branch
      %24 = sbr.rel (0) target = $region21
    $region20: #{encoder_layer.1} parent=1 // pred_region
      _
    $region21: #{encoder_layer.1} parent=1 // pred_fallthru
      _
    // Predicated region
    $region22: #{encoder_layer.1} parent=1 // pred_check
      _
    $region23: #{encoder_layer.1} parent=1 // pred_check_branch
      %26 = sbr.rel (0) target = $region25
    $region24: #{encoder_layer.1} parent=1 // pred_region
      _
    $region25: #{encoder_layer.1} parent=1 // pred_fallthru
      _
    // Predicated region
    $region26: #{encoder_layer.1} parent=1 // pred_check
      _
    $region27: #{encoder_layer.1} parent=1 // pred_check_branch
      %28 = sbr.rel (0) target = $region29
    $region28: #{encoder_layer.1} parent=1 // pred_region
      _
    $region29: #{encoder_layer.1} parent=1 // pred_fallthru
      _
    // Predicated region
    $region30: #{encoder_layer.1} parent=1 // pred_check
      _
    $region31: #{encoder_layer.1} parent=1 // pred_check_branch
      %30 = sbr.rel (0) target = $region33
    $region32: #{encoder_layer.1} parent=1 // pred_region
      _
    $region33: #{encoder_layer.1} parent=1 // pred_fallthru
      _
    // Predicated region
    $region34: #{encoder_layer.1} parent=1 // pred_check
      _
    $region35: #{encoder_layer.1} parent=1 // pred_check_branch
      %32 = sbr.rel (0) target = $region37
    $region36: #{encoder_layer.1} parent=1 // pred_region
      _
    $region37: #{encoder_layer.1} parent=1 // pred_fallthru
      _
    %v33 = vld [vmem:[%s0] sm:$0xff]
    %v34 = vld [vmem:[%s0 + $0x8] sm:$0xff]
    %v35 = vld [vmem:[%s1] sm:$0xff]
    %v36 = vld [vmem:[%s1 + $0x8] sm:$0xff]
    %v37 = vld [vmem:[%s8] sm:$0x3f]
    %v38 = vld [vmem:[%s2] sm:$0xff]
    %v39 = vld [vmem:[%s2 + $0x8] sm:$0xff]
    %v40 = vld [vmem:[%s2 + $0x10] sm:$0xff]
    %v41 = vld [vmem:[%s2 + $0x18] sm:$0xff]
    %v42 = vld [vmem:[%s3] sm:$0x1]
    %v44 = vlaneseq
    %v45 = vshrl.u32 %v44, 7
    %v46 = vsub.s32 0, %v45
    %v47 = vrot.slane %v42, %v46
    %vm49 = vcmask 261120
    %v51 = vsel %vm49, %v33, 0
    %v54 = vsel %vm49, %v34, 0
    %56 = vmatprep.subr.mxu0 0.0
    %57 = vmatpush1.msra.mxu0 %v38
    %58 = vmatprep.subr.mxu0 0.0
    %59 = vmatpush1.msra.mxu0 %v39
    %60 = vmatprep.subr.mxu0 0.0
    %61 = vmatpush1.msra.mxu0 %v40
    %62 = vmatprep.subr.mxu0 0.0
    %63 = vmatpush1.msra.mxu0 %v41
    %64 = vmatprep.subr.mxu0 0.0
    %65 = vmatpush1.msra.mxu0 0.0
    %66 = vmatprep.subr.mxu0 0.0
    %67 = vmatpush1.msra.mxu0 0.0
    %68 = vmatprep.subr.mxu0 0.0
    %69 = vmatpush1.msra.mxu0 0.0
    %70 = vmatprep.subr.mxu0 0.0
    %71 = vmatpush1.msra.mxu0 0.0
    %72 = vmatprep.subr.mxu0 0.0
    %73 = vmatpush1.msra.mxu0 0.0
    %74 = vmatprep.subr.mxu0 0.0
    %75 = vmatpush1.msra.mxu0 0.0
    %76 = vmatprep.subr.mxu0 0.0
    %77 = vmatpush1.msra.mxu0 0.0
    %78 = vmatprep.subr.mxu0 0.0
    %79 = vmatpush1.msra.mxu0 0.0
    %80 = vmatprep.subr.mxu0 0.0
    %81 = vmatpush1.msra.mxu0 0.0
    %82 = vmatprep.subr.mxu0 0.0
    %83 = vmatpush1.msra.mxu0 0.0
    %84 = vmatprep.subr.mxu0 0.0
    %85 = vmatpush1.msra.mxu0 0.0
    %86 = vmatprep.subr.mxu0 0.0
    %87 = vmatpush1.msra.mxu0 0.0
    %88 = vmatprep.subr.mxu0 0.0
    %89 = vmatpush1.msra.mxu0 0.0
    %90 = vmatprep.subr.mxu0 0.0
    %91 = vmatpush1.msra.mxu0 0.0
    %92 = vmatprep.subr.mxu0 0.0
    %93 = vmatpush1.msra.mxu0 0.0
    %94 = vmatprep.subr.mxu0 0.0
    %95 = vmatpush1.msra.mxu0 0.0
    %96 = vmatprep.subr.mxu0 0.0
    %97 = vmatpush1.msra.mxu0 0.0
    %98 = vmatprep.subr.mxu0 0.0
    %99 = vmatpush1.msra.mxu0 0.0
    %100 = vmatprep.subr.mxu0 0.0
    %101 = vmatpush1.msra.mxu0 0.0
    %102 = vmatprep.subr.mxu0 0.0
    %103 = vmatpush1.msra.mxu0 0.0
    %104 = vmatprep.subr.mxu0 0.0
    %105 = vmatpush1.msra.mxu0 0.0
    %106 = vmatprep.subr.mxu0 0.0
    %107 = vmatpush1.msra.mxu0 0.0
    %108 = vmatprep.subr.mxu0 0.0
    %109 = vmatpush1.msra.mxu0 0.0
    %110 = vmatprep.subr.mxu0 0.0
    %111 = vmatpush1.msra.mxu0 0.0
    %112 = vmatprep.subr.mxu0 0.0
    %113 = vmatpush1.msra.mxu0 0.0
    %114 = vmatprep.subr.mxu0 0.0
    %115 = vmatpush1.msra.mxu0 0.0
    %116 = vmatprep.subr.mxu0 0.0
    %117 = vmatpush1.msra.mxu0 0.0
    %118 = vmatprep.subr.mxu0 0.0
    %119 = vmatpush1.msra.mxu0 0.0
    %120 = vmatprep.mubr.f32.mxu0 0.0
    %121 = vmatmul.mubr.f32.gmra.mrb[0].mxu0 %v51
    %v122 = vpop.f32.mrb[0].mxu0
    %v123 = vadd.f32 %v47, %v122
    %v124 = vpop.f32.mrb[0].mxu0
    %125 = vmatprep.mubr.f32.mxu0 0.0
    %126 = vmatmul.mubr.f32.gmra.mrb[0].mxu0 %v54
    %v127 = vpop.f32.mrb[0].mxu0
    %v128 = vadd.f32 %v47, %v127
    %v129 = vpop.f32.mrb[0].mxu0
    %130 = vdwg.mxu0
    %v131 = vld [vmem:[%s4] sm:$0xff]
    %v132 = vld [vmem:[%s4 + $0x8] sm:$0xff]
    %v133 = vld [vmem:[%s4 + $0x10] sm:$0xff]
    %v134 = vld [vmem:[%s4 + $0x18] sm:$0xff]
    %v135 = vmul.f32 %v123, 0.35355338
    %v136 = vmul.f32 %v128, 0.35355338
    %v137 = vlaneseq
    %v138 = vshrl.u32 %v137, 7
    %v139 = vsub.s32 0, %v138
    %v140 = vrot.slane %v37, %v139
    %143 = vrot.lane.b32.xlu0 %v123, 96
    %v144 = vpop.permute.xlu0 %143
    %145 = vrot.lane.b32.xlu0 %v128, 96
    %v146 = vpop.permute.xlu0 %145
    %vm147 = vcmask 64512
    %v149 = vsel %vm147, %v135, 0
    %v152 = vsel %vm147, %v136, 0
    %v154 = vsel %vm147, %v144, 0
    %v156 = vsel %vm147, %v146, 0
    %158 = vmatprep.subr.mxu0 0.0
    %159 = vmatpush1.xpose.msra.mxu0 %v154
    %160 = vmatprep.subr.mxu0 0.0
    %161 = vmatpush1.xpose.msra.mxu0 %v156
    %162 = vmatprep.subr.mxu0 0.0
    %163 = vmatpush1.xpose.msra.mxu0 0.0
    %164 = vmatprep.subr.mxu0 0.0
    %165 = vmatpush1.xpose.msra.mxu0 0.0
    %166 = vmatprep.subr.mxu0 0.0
    %167 = vmatpush1.xpose.msra.mxu0 0.0
    %168 = vmatprep.subr.mxu0 0.0
    %169 = vmatpush1.xpose.msra.mxu0 0.0
    %170 = vmatprep.subr.mxu0 0.0
    %171 = vmatpush1.xpose.msra.mxu0 0.0
    %172 = vmatprep.subr.mxu0 0.0
    %173 = vmatpush1.xpose.msra.mxu0 0.0
    %174 = vmatprep.subr.mxu0 0.0
    %175 = vmatpush1.xpose.msra.mxu0 0.0
    %176 = vmatprep.subr.mxu0 0.0
    %177 = vmatpush1.xpose.msra.mxu0 0.0
    %178 = vmatprep.subr.mxu0 0.0
    %179 = vmatpush1.xpose.msra.mxu0 0.0
    %180 = vmatprep.subr.mxu0 0.0
    %181 = vmatpush1.xpose.msra.mxu0 0.0
    %182 = vmatprep.subr.mxu0 0.0
    %183 = vmatpush1.xpose.msra.mxu0 0.0
    %184 = vmatprep.subr.mxu0 0.0
    %185 = vmatpush1.xpose.msra.mxu0 0.0
    %186 = vmatprep.subr.mxu0 0.0
    %187 = vmatpush1.xpose.msra.mxu0 0.0
    %188 = vmatprep.subr.mxu0 0.0
    %189 = vmatpush1.xpose.msra.mxu0 0.0
    %190 = vmatprep.subr.mxu0 0.0
    %191 = vmatpush1.xpose.msra.mxu0 0.0
    %192 = vmatprep.subr.mxu0 0.0
    %193 = vmatpush1.xpose.msra.mxu0 0.0
    %194 = vmatprep.subr.mxu0 0.0
    %195 = vmatpush1.xpose.msra.mxu0 0.0
    %196 = vmatprep.subr.mxu0 0.0
    %197 = vmatpush1.xpose.msra.mxu0 0.0
    %198 = vmatprep.subr.mxu0 0.0
    %199 = vmatpush1.xpose.msra.mxu0 0.0
    %200 = vmatprep.subr.mxu0 0.0
    %201 = vmatpush1.xpose.msra.mxu0 0.0
    %202 = vmatprep.subr.mxu0 0.0
    %203 = vmatpush1.xpose.msra.mxu0 0.0
    %204 = vmatprep.subr.mxu0 0.0
    %205 = vmatpush1.xpose.msra.mxu0 0.0
    %206 = vmatprep.subr.mxu0 0.0
    %207 = vmatpush1.xpose.msra.mxu0 0.0
    %208 = vmatprep.subr.mxu0 0.0
    %209 = vmatpush1.xpose.msra.mxu0 0.0
    %210 = vmatprep.subr.mxu0 0.0
    %211 = vmatpush1.xpose.msra.mxu0 0.0
    %212 = vmatprep.subr.mxu0 0.0
    %213 = vmatpush1.xpose.msra.mxu0 0.0
    %214 = vmatprep.subr.mxu0 0.0
    %215 = vmatpush1.xpose.msra.mxu0 0.0
    %216 = vmatprep.subr.mxu0 0.0
    %217 = vmatpush1.xpose.msra.mxu0 0.0
    %218 = vmatprep.subr.mxu0 0.0
    %219 = vmatpush1.xpose.msra.mxu0 0.0
    %220 = vmatprep.subr.mxu0 0.0
    %221 = vmatpush1.xpose.msra.mxu0 0.0
    %222 = vmatprep.mubr.f32.mxu0 0.0
    %223 = vmatmul.mubr.f32.gmra.mrb[0].mxu0 %v149
    %v224 = vpop.f32.mrb[0].mxu0
    %v225 = vadd.f32 %v35, %v224
    %v226 = vpop.f32.mrb[0].mxu0
    %227 = vmatprep.mubr.f32.mxu0 0.0
    %228 = vmatmul.mubr.f32.gmra.mrb[0].mxu0 %v152
    %v229 = vpop.f32.mrb[0].mxu0
    %v230 = vadd.f32 %v36, %v229
    %v231 = vpop.f32.mrb[0].mxu0
    %232 = vdwg.mxu0
    %vm233 = vcmask 130048
    %v234 = vsel %vm233, %v225, -inf
    %235 = vmax.xlane.f32.xlu0 %v234
    %v236 = vpop.xlane.xlu0 %235
    %v237 = vsel %vm233, %v230, -inf
    %238 = vmax.xlane.f32.xlu0 %v237
    %v239 = vpop.xlane.xlu0 %238
    %v240 = vsub.f32 %v225, %v236
    %v241 = vsub.f32 %v230, %v239
    %v242 = vmul.f32 %v240, 1.442695
    %v243 = vpow.pop %v242
    %v244 = vmul.f32 %v241, 1.442695
    %v245 = vpow.pop %v244
    %v246 = vsel %vm233, %v243, 0.0
    %247 = vadd.xlane.f32.xlu0 %v246
    %v248 = vpop.xlane.xlu0 %247
    %v249 = vsel %vm233, %v245, 0.0
    %250 = vadd.xlane.f32.xlu0 %v249
    %v251 = vpop.xlane.xlu0 %250
    %v252 = vrcp.pop %v248
    %v253 = vrcp.pop %v251
    %v254 = vmul.f32 %v243, %v252
    %v255 = vmul.f32 %v245, %v253
    %256 = vrot.lane.b32.xlu0 %v123, 64
    %v257 = vpop.permute.xlu0 %256
    %258 = vrot.lane.b32.xlu0 %v128, 64
    %v259 = vpop.permute.xlu0 %258
    %v263 = vsel %vm233, %v254, 0
    %v266 = vsel %vm233, %v255, 0
    %268 = vmatprep.subr.mxu0 0.0
    %269 = vmatpush1.msra.mxu0 %v257
    %270 = vmatprep.subr.mxu0 0.0
    %271 = vmatpush1.msra.mxu0 %v259
    %272 = vmatprep.subr.mxu0 0.0
    %273 = vmatpush1.msra.mxu0 0.0
    %274 = vmatprep.subr.mxu0 0.0
    %275 = vmatpush1.msra.mxu0 0.0
    %276 = vmatprep.subr.mxu0 0.0
    %277 = vmatpush1.msra.mxu0 0.0
    %278 = vmatprep.subr.mxu0 0.0
    %279 = vmatpush1.msra.mxu0 0.0
    %280 = vmatprep.subr.mxu0 0.0
    %281 = vmatpush1.msra.mxu0 0.0
    %282 = vmatprep.subr.mxu0 0.0
    %283 = vmatpush1.msra.mxu0 0.0
    %284 = vmatprep.subr.mxu0 0.0
    %285 = vmatpush1.msra.mxu0 0.0
    %286 = vmatprep.subr.mxu0 0.0
    %287 = vmatpush1.msra.mxu0 0.0
    %288 = vmatprep.subr.mxu0 0.0
    %289 = vmatpush1.msra.mxu0 0.0
    %290 = vmatprep.subr.mxu0 0.0
    %291 = vmatpush1.msra.mxu0 0.0
    %292 = vmatprep.subr.mxu0 0.0
    %293 = vmatpush1.msra.mxu0 0.0
    %294 = vmatprep.subr.mxu0 0.0
    %295 = vmatpush1.msra.mxu0 0.0
    %296 = vmatprep.subr.mxu0 0.0
    %297 = vmatpush1.msra.mxu0 0.0
    %298 = vmatprep.subr.mxu0 0.0
    %299 = vmatpush1.msra.mxu0 0.0
    %300 = vmatprep.subr.mxu0 0.0
    %301 = vmatpush1.msra.mxu0 0.0
    %302 = vmatprep.subr.mxu0 0.0
    %303 = vmatpush1.msra.mxu0 0.0
    %304 = vmatprep.subr.mxu0 0.0
    %305 = vmatpush1.msra.mxu0 0.0
    %306 = vmatprep.subr.mxu0 0.0
    %307 = vmatpush1.msra.mxu0 0.0
    %308 = vmatprep.subr.mxu0 0.0
    %309 = vmatpush1.msra.mxu0 0.0
    %310 = vmatprep.subr.mxu0 0.0
    %311 = vmatpush1.msra.mxu0 0.0
    %312 = vmatprep.subr.mxu0 0.0
    %313 = vmatpush1.msra.mxu0 0.0
    %314 = vmatprep.subr.mxu0 0.0
    %315 = vmatpush1.msra.mxu0 0.0
    %316 = vmatprep.subr.mxu0 0.0
    %317 = vmatpush1.msra.mxu0 0.0
    %318 = vmatprep.subr.mxu0 0.0
    %319 = vmatpush1.msra.mxu0 0.0
    %320 = vmatprep.subr.mxu0 0.0
    %321 = vmatpush1.msra.mxu0 0.0
    %322 = vmatprep.subr.mxu0 0.0
    %323 = vmatpush1.msra.mxu0 0.0
    %324 = vmatprep.subr.mxu0 0.0
    %325 = vmatpush1.msra.mxu0 0.0
    %326 = vmatprep.subr.mxu0 0.0
    %327 = vmatpush1.msra.mxu0 0.0
    %328 = vmatprep.subr.mxu0 0.0
    %329 = vmatpush1.msra.mxu0 0.0
    %330 = vmatprep.subr.mxu0 0.0
    %331 = vmatpush1.msra.mxu0 0.0
    %332 = vmatprep.mubr.f32.mxu0 0.0
    %333 = vmatmul.mubr.f32.gmra.mrb[0].mxu0 %v263
    %v334 = vpop.f32.mrb[0].mxu0
    %v335 = vadd.f32 0.0, %v334
    %v336 = vpop.f32.mrb[0].mxu0
    %337 = vmatprep.mubr.f32.mxu0 0.0
    %338 = vmatmul.mubr.f32.gmra.mrb[0].mxu0 %v266
    %v339 = vpop.f32.mrb[0].mxu0
    %v340 = vadd.f32 0.0, %v339
    %v341 = vpop.f32.mrb[0].mxu0
    %342 = vdwg.mxu0
    %v344 = vsel %vm147, %v335, 0
    %v347 = vsel %vm147, %v340, 0
    %349 = vmatprep.subr.mxu0 0.0
    %350 = vmatpush1.msra.mxu0 %v131
    %351 = vmatprep.subr.mxu0 0.0
    %352 = vmatpush1.msra.mxu0 0.0
    %353 = vmatprep.subr.mxu0 0.0
    %354 = vmatpush1.msra.mxu0 0.0
    %355 = vmatprep.subr.mxu0 0.0
    %356 = vmatpush1.msra.mxu0 0.0
    %357 = vmatprep.subr.mxu0 0.0
    %358 = vmatpush1.msra.mxu0 0.0
    %359 = vmatprep.subr.mxu0 0.0
    %360 = vmatpush1.msra.mxu0 0.0
    %361 = vmatprep.subr.mxu0 0.0
    %362 = vmatpush1.msra.mxu0 0.0
    %363 = vmatprep.subr.mxu0 0.0
    %364 = vmatpush1.msra.mxu0 0.0
    %365 = vmatprep.subr.mxu0 0.0
    %366 = vmatpush1.msra.mxu0 0.0
    %367 = vmatprep.subr.mxu0 0.0
    %368 = vmatpush1.msra.mxu0 0.0
    %369 = vmatprep.subr.mxu0 0.0
    %370 = vmatpush1.msra.mxu0 0.0
    %371 = vmatprep.subr.mxu0 0.0
    %372 = vmatpush1.msra.mxu0 0.0
    %373 = vmatprep.subr.mxu0 0.0
    %374 = vmatpush1.msra.mxu0 0.0
    %375 = vmatprep.subr.mxu0 0.0
    %376 = vmatpush1.msra.mxu0 0.0
    %377 = vmatprep.subr.mxu0 0.0
    %378 = vmatpush1.msra.mxu0 0.0
    %379 = vmatprep.subr.mxu0 0.0
    %380 = vmatpush1.msra.mxu0 0.0
    %381 = vmatprep.subr.mxu0 0.0
    %382 = vmatpush1.msra.mxu0 0.0
    %383 = vmatprep.subr.mxu0 0.0
    %384 = vmatpush1.msra.mxu0 0.0
    %385 = vmatprep.subr.mxu0 0.0
    %386 = vmatpush1.msra.mxu0 0.0
    %387 = vmatprep.subr.mxu0 0.0
    %388 = vmatpush1.msra.mxu0 0.0
    %389 = vmatprep.subr.mxu0 0.0
    %390 = vmatpush1.msra.mxu0 0.0
    %391 = vmatprep.subr.mxu0 0.0
    %392 = vmatpush1.msra.mxu0 0.0
    %393 = vmatprep.subr.mxu0 0.0
    %394 = vmatpush1.msra.mxu0 0.0
    %395 = vmatprep.subr.mxu0 0.0
    %396 = vmatpush1.msra.mxu0 0.0
    %397 = vmatprep.subr.mxu0 0.0
    %398 = vmatpush1.msra.mxu0 0.0
    %399 = vmatprep.subr.mxu0 0.0
    %400 = vmatpush1.msra.mxu0 0.0
    %401 = vmatprep.subr.mxu0 0.0
    %402 = vmatpush1.msra.mxu0 0.0
    %403 = vmatprep.subr.mxu0 0.0
    %404 = vmatpush1.msra.mxu0 0.0
    %405 = vmatprep.subr.mxu0 0.0
    %406 = vmatpush1.msra.mxu0 0.0
    %407 = vmatprep.subr.mxu0 0.0
    %408 = vmatpush1.msra.mxu0 0.0
    %409 = vmatprep.subr.mxu0 0.0
    %410 = vmatpush1.msra.mxu0 0.0
    %411 = vmatprep.subr.mxu0 0.0
    %412 = vmatpush1.msra.mxu0 0.0
    %413 = vmatprep.mubr.f32.mxu0 0.0
    %414 = vmatmul.mubr.f32.gmra.mrb[0].mxu0 %v344
    %v415 = vpop.f32.mrb[0].mxu0
    %v416 = vadd.f32 0.0, %v415
    %v417 = vpop.f32.mrb[0].mxu0
    %418 = vmatprep.mubr.f32.mxu0 0.0
    %419 = vmatmul.mubr.f32.gmra.mrb[0].mxu0 %v347
    %v420 = vpop.f32.mrb[0].mxu0
    %v421 = vadd.f32 0.0, %v420
    %v422 = vpop.f32.mrb[0].mxu0
    %423 = vdwg.mxu0
    %v424 = vadd.f32 %v140, %v416
    %v425 = vadd.f32 %v140, %v421
    %426 = vrot.lane.b32.xlu0 %v135, 120
    %v427 = vpop.permute.xlu0 %426
    %428 = vrot.lane.b32.xlu0 %v136, 120
    %v429 = vpop.permute.xlu0 %428
    %430 = vrot.lane.b32.xlu0 %v123, 88
    %v431 = vpop.permute.xlu0 %430
    %432 = vrot.lane.b32.xlu0 %v128, 88
    %v433 = vpop.permute.xlu0 %432
    %v434 = vsel %vm147, %v427, 0
    %v436 = vsel %vm147, %v429, 0
    %v438 = vsel %vm147, %v431, 0
    %v440 = vsel %vm147, %v433, 0
    %442 = vmatprep.subr.mxu0 0.0
    %443 = vmatpush1.xpose.msra.mxu0 %v438
    %444 = vmatprep.subr.mxu0 0.0
    %445 = vmatpush1.xpose.msra.mxu0 %v440
    %446 = vmatprep.subr.mxu0 0.0
    %447 = vmatpush1.xpose.msra.mxu0 0.0
    %448 = vmatprep.subr.mxu0 0.0
    %449 = vmatpush1.xpose.msra.mxu0 0.0
    %450 = vmatprep.subr.mxu0 0.0
    %451 = vmatpush1.xpose.msra.mxu0 0.0
    %452 = vmatprep.subr.mxu0 0.0
    %453 = vmatpush1.xpose.msra.mxu0 0.0
    %454 = vmatprep.subr.mxu0 0.0
    %455 = vmatpush1.xpose.msra.mxu0 0.0
    %456 = vmatprep.subr.mxu0 0.0
    %457 = vmatpush1.xpose.msra.mxu0 0.0
    %458 = vmatprep.subr.mxu0 0.0
    %459 = vmatpush1.xpose.msra.mxu0 0.0
    %460 = vmatprep.subr.mxu0 0.0
    %461 = vmatpush1.xpose.msra.mxu0 0.0
    %462 = vmatprep.subr.mxu0 0.0
    %463 = vmatpush1.xpose.msra.mxu0 0.0
    %464 = vmatprep.subr.mxu0 0.0
    %465 = vmatpush1.xpose.msra.mxu0 0.0
    %466 = vmatprep.subr.mxu0 0.0
    %467 = vmatpush1.xpose.msra.mxu0 0.0
    %468 = vmatprep.subr.mxu0 0.0
    %469 = vmatpush1.xpose.msra.mxu0 0.0
    %470 = vmatprep.subr.mxu0 0.0
    %471 = vmatpush1.xpose.msra.mxu0 0.0
    %472 = vmatprep.subr.mxu0 0.0
    %473 = vmatpush1.xpose.msra.mxu0 0.0
    %474 = vmatprep.subr.mxu0 0.0
    %475 = vmatpush1.xpose.msra.mxu0 0.0
    %476 = vmatprep.subr.mxu0 0.0
    %477 = vmatpush1.xpose.msra.mxu0 0.0
    %478 = vmatprep.subr.mxu0 0.0
    %479 = vmatpush1.xpose.msra.mxu0 0.0
    %480 = vmatprep.subr.mxu0 0.0
    %481 = vmatpush1.xpose.msra.mxu0 0.0
    %482 = vmatprep.subr.mxu0 0.0
    %483 = vmatpush1.xpose.msra.mxu0 0.0
    %484 = vmatprep.subr.mxu0 0.0
    %485 = vmatpush1.xpose.msra.mxu0 0.0
    %486 = vmatprep.subr.mxu0 0.0
    %487 = vmatpush1.xpose.msra.mxu0 0.0
    %488 = vmatprep.subr.mxu0 0.0
    %489 = vmatpush1.xpose.msra.mxu0 0.0
    %490 = vmatprep.subr.mxu0 0.0
    %491 = vmatpush1.xpose.msra.mxu0 0.0
    %492 = vmatprep.subr.mxu0 0.0
    %493 = vmatpush1.xpose.msra.mxu0 0.0
    %494 = vmatprep.subr.mxu0 0.0
    %495 = vmatpush1.xpose.msra.mxu0 0.0
    %496 = vmatprep.subr.mxu0 0.0
    %497 = vmatpush1.xpose.msra.mxu0 0.0
    %498 = vmatprep.subr.mxu0 0.0
    %499 = vmatpush1.xpose.msra.mxu0 0.0
    %500 = vmatprep.subr.mxu0 0.0
    %501 = vmatpush1.xpose.msra.mxu0 0.0
    %502 = vmatprep.subr.mxu0 0.0
    %503 = vmatpush1.xpose.msra.mxu0 0.0
    %504 = vmatprep.subr.mxu0 0.0
    %505 = vmatpush1.xpose.msra.mxu0 0.0
    %506 = vmatprep.mubr.f32.mxu0 0.0
    %507 = vmatmul.mubr.f32.gmra.mrb[0].mxu0 %v434
    %v508 = vpop.f32.mrb[0].mxu0
    %v509 = vadd.f32 %v35, %v508
    %v510 = vpop.f32.mrb[0].mxu0
    %511 = vmatprep.mubr.f32.mxu0 0.0
    %512 = vmatmul.mubr.f32.gmra.mrb[0].mxu0 %v436
    %v513 = vpop.f32.mrb[0].mxu0
    %v514 = vadd.f32 %v36, %v513
    %v515 = vpop.f32.mrb[0].mxu0
    %516 = vdwg.mxu0
    %v517 = vsel %vm233, %v509, -inf
    %518 = vmax.xlane.f32.xlu0 %v517
    %v519 = vpop.xlane.xlu0 %518
    %v520 = vsel %vm233, %v514, -inf
    %521 = vmax.xlane.f32.xlu0 %v520
    %v522 = vpop.xlane.xlu0 %521
    %v523 = vsub.f32 %v509, %v519
    %v524 = vsub.f32 %v514, %v522
    %v525 = vmul.f32 %v523, 1.442695
    %v526 = vpow.pop %v525
    %v527 = vmul.f32 %v524, 1.442695
    %v528 = vpow.pop %v527
    %v529 = vsel %vm233, %v526, 0.0
    %530 = vadd.xlane.f32.xlu0 %v529
    %v531 = vpop.xlane.xlu0 %530
    %v532 = vsel %vm233, %v528, 0.0
    %533 = vadd.xlane.f32.xlu0 %v532
    %v534 = vpop.xlane.xlu0 %533
    %v535 = vrcp.pop %v531
    %v536 = vrcp.pop %v534
    %v537 = vmul.f32 %v526, %v535
    %v538 = vmul.f32 %v528, %v536
    %539 = vrot.lane.b32.xlu0 %v123, 56
    %v540 = vpop.permute.xlu0 %539
    %541 = vrot.lane.b32.xlu0 %v128, 56
    %v542 = vpop.permute.xlu0 %541
    %v546 = vsel %vm233, %v537, 0
    %v549 = vsel %vm233, %v538, 0
    %551 = vmatprep.subr.mxu0 0.0
    %552 = vmatpush1.msra.mxu0 %v540
    %553 = vmatprep.subr.mxu0 0.0
    %554 = vmatpush1.msra.mxu0 %v542
    %555 = vmatprep.subr.mxu0 0.0
    %556 = vmatpush1.msra.mxu0 0.0
    %557 = vmatprep.subr.mxu0 0.0
    %558 = vmatpush1.msra.mxu0 0.0
    %559 = vmatprep.subr.mxu0 0.0
    %560 = vmatpush1.msra.mxu0 0.0
    %561 = vmatprep.subr.mxu0 0.0
    %562 = vmatpush1.msra.mxu0 0.0
    %563 = vmatprep.subr.mxu0 0.0
    %564 = vmatpush1.msra.mxu0 0.0
    %565 = vmatprep.subr.mxu0 0.0
    %566 = vmatpush1.msra.mxu0 0.0
    %567 = vmatprep.subr.mxu0 0.0
    %568 = vmatpush1.msra.mxu0 0.0
    %569 = vmatprep.subr.mxu0 0.0
    %570 = vmatpush1.msra.mxu0 0.0
    %571 = vmatprep.subr.mxu0 0.0
    %572 = vmatpush1.msra.mxu0 0.0
    %573 = vmatprep.subr.mxu0 0.0
    %574 = vmatpush1.msra.mxu0 0.0
    %575 = vmatprep.subr.mxu0 0.0
    %576 = vmatpush1.msra.mxu0 0.0
    %577 = vmatprep.subr.mxu0 0.0
    %578 = vmatpush1.msra.mxu0 0.0
    %579 = vmatprep.subr.mxu0 0.0
    %580 = vmatpush1.msra.mxu0 0.0
    %581 = vmatprep.subr.mxu0 0.0
    %582 = vmatpush1.msra.mxu0 0.0
    %583 = vmatprep.subr.mxu0 0.0
    %584 = vmatpush1.msra.mxu0 0.0
    %585 = vmatprep.subr.mxu0 0.0
    %586 = vmatpush1.msra.mxu0 0.0
    %587 = vmatprep.subr.mxu0 0.0
    %588 = vmatpush1.msra.mxu0 0.0
    %589 = vmatprep.subr.mxu0 0.0
    %590 = vmatpush1.msra.mxu0 0.0
    %591 = vmatprep.subr.mxu0 0.0
    %592 = vmatpush1.msra.mxu0 0.0
    %593 = vmatprep.subr.mxu0 0.0
    %594 = vmatpush1.msra.mxu0 0.0
    %595 = vmatprep.subr.mxu0 0.0
    %596 = vmatpush1.msra.mxu0 0.0
    %597 = vmatprep.subr.mxu0 0.0
    %598 = vmatpush1.msra.mxu0 0.0
    %599 = vmatprep.subr.mxu0 0.0
    %600 = vmatpush1.msra.mxu0 0.0
    %601 = vmatprep.subr.mxu0 0.0
    %602 = vmatpush1.msra.mxu0 0.0
    %603 = vmatprep.subr.mxu0 0.0
    %604 = vmatpush1.msra.mxu0 0.0
    %605 = vmatprep.subr.mxu0 0.0
    %606 = vmatpush1.msra.mxu0 0.0
    %607 = vmatprep.subr.mxu0 0.0
    %608 = vmatpush1.msra.mxu0 0.0
    %609 = vmatprep.subr.mxu0 0.0
    %610 = vmatpush1.msra.mxu0 0.0
    %611 = vmatprep.subr.mxu0 0.0
    %612 = vmatpush1.msra.mxu0 0.0
    %613 = vmatprep.subr.mxu0 0.0
    %614 = vmatpush1.msra.mxu0 0.0
    %615 = vmatprep.mubr.f32.mxu0 0.0
    %616 = vmatmul.mubr.f32.gmra.mrb[0].mxu0 %v546
    %v617 = vpop.f32.mrb[0].mxu0
    %v618 = vadd.f32 0.0, %v617
    %v619 = vpop.f32.mrb[0].mxu0
    %620 = vmatprep.mubr.f32.mxu0 0.0
    %621 = vmatmul.mubr.f32.gmra.mrb[0].mxu0 %v549
    %v622 = vpop.f32.mrb[0].mxu0
    %v623 = vadd.f32 0.0, %v622
    %v624 = vpop.f32.mrb[0].mxu0
    %625 = vdwg.mxu0
    %v627 = vsel %vm147, %v618, 0
    %v630 = vsel %vm147, %v623, 0
    %632 = vmatprep.subr.mxu0 0.0
    %633 = vmatpush1.msra.mxu0 %v132
    %634 = vmatprep.subr.mxu0 0.0
    %635 = vmatpush1.msra.mxu0 0.0
    %636 = vmatprep.subr.mxu0 0.0
    %637 = vmatpush1.msra.mxu0 0.0
    %638 = vmatprep.subr.mxu0 0.0
    %639 = vmatpush1.msra.mxu0 0.0
    %640 = vmatprep.subr.mxu0 0.0
    %641 = vmatpush1.msra.mxu0 0.0
    %642 = vmatprep.subr.mxu0 0.0
    %643 = vmatpush1.msra.mxu0 0.0
    %644 = vmatprep.subr.mxu0 0.0
    %645 = vmatpush1.msra.mxu0 0.0
    %646 = vmatprep.subr.mxu0 0.0
    %647 = vmatpush1.msra.mxu0 0.0
    %648 = vmatprep.subr.mxu0 0.0
    %649 = vmatpush1.msra.mxu0 0.0
    %650 = vmatprep.subr.mxu0 0.0
    %651 = vmatpush1.msra.mxu0 0.0
    %652 = vmatprep.subr.mxu0 0.0
    %653 = vmatpush1.msra.mxu0 0.0
    %654 = vmatprep.subr.mxu0 0.0
    %655 = vmatpush1.msra.mxu0 0.0
    %656 = vmatprep.subr.mxu0 0.0
    %657 = vmatpush1.msra.mxu0 0.0
    %658 = vmatprep.subr.mxu0 0.0
    %659 = vmatpush1.msra.mxu0 0.0
    %660 = vmatprep.subr.mxu0 0.0
    %661 = vmatpush1.msra.mxu0 0.0
    %662 = vmatprep.subr.mxu0 0.0
    %663 = vmatpush1.msra.mxu0 0.0
    %664 = vmatprep.subr.mxu0 0.0
    %665 = vmatpush1.msra.mxu0 0.0
    %666 = vmatprep.subr.mxu0 0.0
    %667 = vmatpush1.msra.mxu0 0.0
    %668 = vmatprep.subr.mxu0 0.0
    %669 = vmatpush1.msra.mxu0 0.0
    %670 = vmatprep.subr.mxu0 0.0
    %671 = vmatpush1.msra.mxu0 0.0
    %672 = vmatprep.subr.mxu0 0.0
    %673 = vmatpush1.msra.mxu0 0.0
    %674 = vmatprep.subr.mxu0 0.0
    %675 = vmatpush1.msra.mxu0 0.0
    %676 = vmatprep.subr.mxu0 0.0
    %677 = vmatpush1.msra.mxu0 0.0
    %678 = vmatprep.subr.mxu0 0.0
    %679 = vmatpush1.msra.mxu0 0.0
    %680 = vmatprep.subr.mxu0 0.0
    %681 = vmatpush1.msra.mxu0 0.0
    %682 = vmatprep.subr.mxu0 0.0
    %683 = vmatpush1.msra.mxu0 0.0
    %684 = vmatprep.subr.mxu0 0.0
    %685 = vmatpush1.msra.mxu0 0.0
    %686 = vmatprep.subr.mxu0 0.0
    %687 = vmatpush1.msra.mxu0 0.0
    %688 = vmatprep.subr.mxu0 0.0
    %689 = vmatpush1.msra.mxu0 0.0
    %690 = vmatprep.subr.mxu0 0.0
    %691 = vmatpush1.msra.mxu0 0.0
    %692 = vmatprep.subr.mxu0 0.0
    %693 = vmatpush1.msra.mxu0 0.0
    %694 = vmatprep.subr.mxu0 0.0
    %695 = vmatpush1.msra.mxu0 0.0
    %696 = vmatprep.mubr.f32.mxu0 0.0
    %697 = vmatmul.mubr.f32.gmra.mrb[0].mxu0 %v627
    %v698 = vpop.f32.mrb[0].mxu0
    %v699 = vadd.f32 0.0, %v698
    %v700 = vpop.f32.mrb[0].mxu0
    %701 = vmatprep.mubr.f32.mxu0 0.0
    %702 = vmatmul.mubr.f32.gmra.mrb[0].mxu0 %v630
    %v703 = vpop.f32.mrb[0].mxu0
    %v704 = vadd.f32 0.0, %v703
    %v705 = vpop.f32.mrb[0].mxu0
    %706 = vdwg.mxu0
    %v707 = vadd.f32 %v424, %v699
    %v708 = vadd.f32 %v425, %v704
    %709 = vrot.lane.b32.xlu0 %v135, 112
    %v710 = vpop.permute.xlu0 %709
    %711 = vrot.lane.b32.xlu0 %v136, 112
    %v712 = vpop.permute.xlu0 %711
    %713 = vrot.lane.b32.xlu0 %v123, 80
    %v714 = vpop.permute.xlu0 %713
    %715 = vrot.lane.b32.xlu0 %v128, 80
    %v716 = vpop.permute.xlu0 %715
    %v717 = vsel %vm147, %v710, 0
    %v719 = vsel %vm147, %v712, 0
    %v721 = vsel %vm147, %v714, 0
    %v723 = vsel %vm147, %v716, 0
    %725 = vmatprep.subr.mxu0 0.0
    %726 = vmatpush1.xpose.msra.mxu0 %v721
    %727 = vmatprep.subr.mxu0 0.0
    %728 = vmatpush1.xpose.msra.mxu0 %v723
    %729 = vmatprep.subr.mxu0 0.0
    %730 = vmatpush1.xpose.msra.mxu0 0.0
    %731 = vmatprep.subr.mxu0 0.0
    %732 = vmatpush1.xpose.msra.mxu0 0.0
    %733 = vmatprep.subr.mxu0 0.0
    %734 = vmatpush1.xpose.msra.mxu0 0.0
    %735 = vmatprep.subr.mxu0 0.0
    %736 = vmatpush1.xpose.msra.mxu0 0.0
    %737 = vmatprep.subr.mxu0 0.0
    %738 = vmatpush1.xpose.msra.mxu0 0.0
    %739 = vmatprep.subr.mxu0 0.0
    %740 = vmatpush1.xpose.msra.mxu0 0.0
    %741 = vmatprep.subr.mxu0 0.0
    %742 = vmatpush1.xpose.msra.mxu0 0.0
    %743 = vmatprep.subr.mxu0 0.0
    %744 = vmatpush1.xpose.msra.mxu0 0.0
    %745 = vmatprep.subr.mxu0 0.0
    %746 = vmatpush1.xpose.msra.mxu0 0.0
    %747 = vmatprep.subr.mxu0 0.0
    %748 = vmatpush1.xpose.msra.mxu0 0.0
    %749 = vmatprep.subr.mxu0 0.0
    %750 = vmatpush1.xpose.msra.mxu0 0.0
    %751 = vmatprep.subr.mxu0 0.0
    %752 = vmatpush1.xpose.msra.mxu0 0.0
    %753 = vmatprep.subr.mxu0 0.0
    %754 = vmatpush1.xpose.msra.mxu0 0.0
    %755 = vmatprep.subr.mxu0 0.0
    %756 = vmatpush1.xpose.msra.mxu0 0.0
    %757 = vmatprep.subr.mxu0 0.0
    %758 = vmatpush1.xpose.msra.mxu0 0.0
    %759 = vmatprep.subr.mxu0 0.0
    %760 = vmatpush1.xpose.msra.mxu0 0.0
    %761 = vmatprep.subr.mxu0 0.0
    %762 = vmatpush1.xpose.msra.mxu0 0.0
    %763 = vmatprep.subr.mxu0 0.0
    %764 = vmatpush1.xpose.msra.mxu0 0.0
    %765 = vmatprep.subr.mxu0 0.0
    %766 = vmatpush1.xpose.msra.mxu0 0.0
    %767 = vmatprep.subr.mxu0 0.0
    %768 = vmatpush1.xpose.msra.mxu0 0.0
    %769 = vmatprep.subr.mxu0 0.0
    %770 = vmatpush1.xpose.msra.mxu0 0.0
    %771 = vmatprep.subr.mxu0 0.0
    %772 = vmatpush1.xpose.msra.mxu0 0.0
    %773 = vmatprep.subr.mxu0 0.0
    %774 = vmatpush1.xpose.msra.mxu0 0.0
    %775 = vmatprep.subr.mxu0 0.0
    %776 = vmatpush1.xpose.msra.mxu0 0.0
    %777 = vmatprep.subr.mxu0 0.0
    %778 = vmatpush1.xpose.msra.mxu0 0.0
    %779 = vmatprep.subr.mxu0 0.0
    %780 = vmatpush1.xpose.msra.mxu0 0.0
    %781 = vmatprep.subr.mxu0 0.0
    %782 = vmatpush1.xpose.msra.mxu0 0.0
    %783 = vmatprep.subr.mxu0 0.0
    %784 = vmatpush1.xpose.msra.mxu0 0.0
    %785 = vmatprep.subr.mxu0 0.0
    %786 = vmatpush1.xpose.msra.mxu0 0.0
    %787 = vmatprep.subr.mxu0 0.0
    %788 = vmatpush1.xpose.msra.mxu0 0.0
    %789 = vmatprep.mubr.f32.mxu0 0.0
    %790 = vmatmul.mubr.f32.gmra.mrb[0].mxu0 %v717
    %v791 = vpop.f32.mrb[0].mxu0
    %v792 = vadd.f32 %v35, %v791
    %v793 = vpop.f32.mrb[0].mxu0
    %794 = vmatprep.mubr.f32.mxu0 0.0
    %795 = vmatmul.mubr.f32.gmra.mrb[0].mxu0 %v719
    %v796 = vpop.f32.mrb[0].mxu0
    %v797 = vadd.f32 %v36, %v796
    %v798 = vpop.f32.mrb[0].mxu0
    %799 = vdwg.mxu0
    %v800 = vsel %vm233, %v792, -inf
    %801 = vmax.xlane.f32.xlu0 %v800
    %v802 = vpop.xlane.xlu0 %801
    %v803 = vsel %vm233, %v797, -inf
    %804 = vmax.xlane.f32.xlu0 %v803
    %v805 = vpop.xlane.xlu0 %804
    %v806 = vsub.f32 %v792, %v802
    %v807 = vsub.f32 %v797, %v805
    %v808 = vmul.f32 %v806, 1.442695
    %v809 = vpow.pop %v808
    %v810 = vmul.f32 %v807, 1.442695
    %v811 = vpow.pop %v810
    %v812 = vsel %vm233, %v809, 0.0
    %813 = vadd.xlane.f32.xlu0 %v812
    %v814 = vpop.xlane.xlu0 %813
    %v815 = vsel %vm233, %v811, 0.0
    %816 = vadd.xlane.f32.xlu0 %v815
    %v817 = vpop.xlane.xlu0 %816
    %v818 = vrcp.pop %v814
    %v819 = vrcp.pop %v817
    %v820 = vmul.f32 %v809, %v818
    %v821 = vmul.f32 %v811, %v819
    %822 = vrot.lane.b32.xlu0 %v123, 48
    %v823 = vpop.permute.xlu0 %822
    %824 = vrot.lane.b32.xlu0 %v128, 48
    %v825 = vpop.permute.xlu0 %824
    %v829 = vsel %vm233, %v820, 0
    %v832 = vsel %vm233, %v821, 0
    %834 = vmatprep.subr.mxu0 0.0
    %835 = vmatpush1.msra.mxu0 %v823
    %836 = vmatprep.subr.mxu0 0.0
    %837 = vmatpush1.msra.mxu0 %v825
    %838 = vmatprep.subr.mxu0 0.0
    %839 = vmatpush1.msra.mxu0 0.0
    %840 = vmatprep.subr.mxu0 0.0
    %841 = vmatpush1.msra.mxu0 0.0
    %842 = vmatprep.subr.mxu0 0.0
    %843 = vmatpush1.msra.mxu0 0.0
    %844 = vmatprep.subr.mxu0 0.0
    %845 = vmatpush1.msra.mxu0 0.0
    %846 = vmatprep.subr.mxu0 0.0
    %847 = vmatpush1.msra.mxu0 0.0
    %848 = vmatprep.subr.mxu0 0.0
    %849 = vmatpush1.msra.mxu0 0.0
    %850 = vmatprep.subr.mxu0 0.0
    %851 = vmatpush1.msra.mxu0 0.0
    %852 = vmatprep.subr.mxu0 0.0
    %853 = vmatpush1.msra.mxu0 0.0
    %854 = vmatprep.subr.mxu0 0.0
    %855 = vmatpush1.msra.mxu0 0.0
    %856 = vmatprep.subr.mxu0 0.0
    %857 = vmatpush1.msra.mxu0 0.0
    %858 = vmatprep.subr.mxu0 0.0
    %859 = vmatpush1.msra.mxu0 0.0
    %860 = vmatprep.subr.mxu0 0.0
    %861 = vmatpush1.msra.mxu0 0.0
    %862 = vmatprep.subr.mxu0 0.0
    %863 = vmatpush1.msra.mxu0 0.0
    %864 = vmatprep.subr.mxu0 0.0
    %865 = vmatpush1.msra.mxu0 0.0
    %866 = vmatprep.subr.mxu0 0.0
    %867 = vmatpush1.msra.mxu0 0.0
    %868 = vmatprep.subr.mxu0 0.0
    %869 = vmatpush1.msra.mxu0 0.0
    %870 = vmatprep.subr.mxu0 0.0
    %871 = vmatpush1.msra.mxu0 0.0
    %872 = vmatprep.subr.mxu0 0.0
    %873 = vmatpush1.msra.mxu0 0.0
    %874 = vmatprep.subr.mxu0 0.0
    %875 = vmatpush1.msra.mxu0 0.0
    %876 = vmatprep.subr.mxu0 0.0
    %877 = vmatpush1.msra.mxu0 0.0
    %878 = vmatprep.subr.mxu0 0.0
    %879 = vmatpush1.msra.mxu0 0.0
    %880 = vmatprep.subr.mxu0 0.0
    %881 = vmatpush1.msra.mxu0 0.0
    %882 = vmatprep.subr.mxu0 0.0
    %883 = vmatpush1.msra.mxu0 0.0
    %884 = vmatprep.subr.mxu0 0.0
    %885 = vmatpush1.msra.mxu0 0.0
    %886 = vmatprep.subr.mxu0 0.0
    %887 = vmatpush1.msra.mxu0 0.0
    %888 = vmatprep.subr.mxu0 0.0
    %889 = vmatpush1.msra.mxu0 0.0
    %890 = vmatprep.subr.mxu0 0.0
    %891 = vmatpush1.msra.mxu0 0.0
    %892 = vmatprep.subr.mxu0 0.0
    %893 = vmatpush1.msra.mxu0 0.0
    %894 = vmatprep.subr.mxu0 0.0
    %895 = vmatpush1.msra.mxu0 0.0
    %896 = vmatprep.subr.mxu0 0.0
    %897 = vmatpush1.msra.mxu0 0.0
    %898 = vmatprep.mubr.f32.mxu0 0.0
    %899 = vmatmul.mubr.f32.gmra.mrb[0].mxu0 %v829
    %v900 = vpop.f32.mrb[0].mxu0
    %v901 = vadd.f32 0.0, %v900
    %v902 = vpop.f32.mrb[0].mxu0
    %903 = vmatprep.mubr.f32.mxu0 0.0
    %904 = vmatmul.mubr.f32.gmra.mrb[0].mxu0 %v832
    %v905 = vpop.f32.mrb[0].mxu0
    %v906 = vadd.f32 0.0, %v905
    %v907 = vpop.f32.mrb[0].mxu0
    %908 = vdwg.mxu0
    %v910 = vsel %vm147, %v901, 0
    %v913 = vsel %vm147, %v906, 0
    %915 = vmatprep.subr.mxu0 0.0
    %916 = vmatpush1.msra.mxu0 %v133
    %917 = vmatprep.subr.mxu0 0.0
    %918 = vmatpush1.msra.mxu0 0.0
    %919 = vmatprep.subr.mxu0 0.0
    %920 = vmatpush1.msra.mxu0 0.0
    %921 = vmatprep.subr.mxu0 0.0
    %922 = vmatpush1.msra.mxu0 0.0
    %923 = vmatprep.subr.mxu0 0.0
    %924 = vmatpush1.msra.mxu0 0.0
    %925 = vmatprep.subr.mxu0 0.0
    %926 = vmatpush1.msra.mxu0 0.0
    %927 = vmatprep.subr.mxu0 0.0
    %928 = vmatpush1.msra.mxu0 0.0
    %929 = vmatprep.subr.mxu0 0.0
    %930 = vmatpush1.msra.mxu0 0.0
    %931 = vmatprep.subr.mxu0 0.0
    %932 = vmatpush1.msra.mxu0 0.0
    %933 = vmatprep.subr.mxu0 0.0
    %934 = vmatpush1.msra.mxu0 0.0
    %935 = vmatprep.subr.mxu0 0.0
    %936 = vmatpush1.msra.mxu0 0.0
    %937 = vmatprep.subr.mxu0 0.0
    %938 = vmatpush1.msra.mxu0 0.0
    %939 = vmatprep.subr.mxu0 0.0
    %940 = vmatpush1.msra.mxu0 0.0
    %941 = vmatprep.subr.mxu0 0.0
    %942 = vmatpush1.msra.mxu0 0.0
    %943 = vmatprep.subr.mxu0 0.0
    %944 = vmatpush1.msra.mxu0 0.0
    %945 = vmatprep.subr.mxu0 0.0
    %946 = vmatpush1.msra.mxu0 0.0
    %947 = vmatprep.subr.mxu0 0.0
    %948 = vmatpush1.msra.mxu0 0.0
    %949 = vmatprep.subr.mxu0 0.0
    %950 = vmatpush1.msra.mxu0 0.0
    %951 = vmatprep.subr.mxu0 0.0
    %952 = vmatpush1.msra.mxu0 0.0
    %953 = vmatprep.subr.mxu0 0.0
    %954 = vmatpush1.msra.mxu0 0.0
    %955 = vmatprep.subr.mxu0 0.0
    %956 = vmatpush1.msra.mxu0 0.0
    %957 = vmatprep.subr.mxu0 0.0
    %958 = vmatpush1.msra.mxu0 0.0
    %959 = vmatprep.subr.mxu0 0.0
    %960 = vmatpush1.msra.mxu0 0.0
    %961 = vmatprep.subr.mxu0 0.0
    %962 = vmatpush1.msra.mxu0 0.0
    %963 = vmatprep.subr.mxu0 0.0
    %964 = vmatpush1.msra.mxu0 0.0
    %965 = vmatprep.subr.mxu0 0.0
    %966 = vmatpush1.msra.mxu0 0.0
    %967 = vmatprep.subr.mxu0 0.0
    %968 = vmatpush1.msra.mxu0 0.0
    %969 = vmatprep.subr.mxu0 0.0
    %970 = vmatpush1.msra.mxu0 0.0
    %971 = vmatprep.subr.mxu0 0.0
    %972 = vmatpush1.msra.mxu0 0.0
    %973 = vmatprep.subr.mxu0 0.0
    %974 = vmatpush1.msra.mxu0 0.0
    %975 = vmatprep.subr.mxu0 0.0
    %976 = vmatpush1.msra.mxu0 0.0
    %977 = vmatprep.subr.mxu0 0.0
    %978 = vmatpush1.msra.mxu0 0.0
    %979 = vmatprep.mubr.f32.mxu0 0.0
    %980 = vmatmul.mubr.f32.gmra.mrb[0].mxu0 %v910
    %v981 = vpop.f32.mrb[0].mxu0
    %v982 = vadd.f32 0.0, %v981
    %v983 = vpop.f32.mrb[0].mxu0
    %984 = vmatprep.mubr.f32.mxu0 0.0
    %985 = vmatmul.mubr.f32.gmra.mrb[0].mxu0 %v913
    %v986 = vpop.f32.mrb[0].mxu0
    %v987 = vadd.f32 0.0, %v986
    %v988 = vpop.f32.mrb[0].mxu0
    %989 = vdwg.mxu0
    %v990 = vadd.f32 %v707, %v982
    %v991 = vadd.f32 %v708, %v987
    %992 = vrot.lane.b32.xlu0 %v135, 104
    %v993 = vpop.permute.xlu0 %992
    %994 = vrot.lane.b32.xlu0 %v136, 104
    %v995 = vpop.permute.xlu0 %994
    %996 = vrot.lane.b32.xlu0 %v123, 72
    %v997 = vpop.permute.xlu0 %996
    %998 = vrot.lane.b32.xlu0 %v128, 72
    %v999 = vpop.permute.xlu0 %998
    %v1000 = vsel %vm147, %v993, 0
    %v1002 = vsel %vm147, %v995, 0
    %v1004 = vsel %vm147, %v997, 0
    %v1006 = vsel %vm147, %v999, 0
    %1008 = vmatprep.subr.mxu0 0.0
    %1009 = vmatpush1.xpose.msra.mxu0 %v1004
    %1010 = vmatprep.subr.mxu0 0.0
    %1011 = vmatpush1.xpose.msra.mxu0 %v1006
    %1012 = vmatprep.subr.mxu0 0.0
    %1013 = vmatpush1.xpose.msra.mxu0 0.0
    %1014 = vmatprep.subr.mxu0 0.0
    %1015 = vmatpush1.xpose.msra.mxu0 0.0
    %1016 = vmatprep.subr.mxu0 0.0
    %1017 = vmatpush1.xpose.msra.mxu0 0.0
    %1018 = vmatprep.subr.mxu0 0.0
    %1019 = vmatpush1.xpose.msra.mxu0 0.0
    %1020 = vmatprep.subr.mxu0 0.0
    %1021 = vmatpush1.xpose.msra.mxu0 0.0
    %1022 = vmatprep.subr.mxu0 0.0
    %1023 = vmatpush1.xpose.msra.mxu0 0.0
    %1024 = vmatprep.subr.mxu0 0.0
    %1025 = vmatpush1.xpose.msra.mxu0 0.0
    %1026 = vmatprep.subr.mxu0 0.0
    %1027 = vmatpush1.xpose.msra.mxu0 0.0
    %1028 = vmatprep.subr.mxu0 0.0
    %1029 = vmatpush1.xpose.msra.mxu0 0.0
    %1030 = vmatprep.subr.mxu0 0.0
    %1031 = vmatpush1.xpose.msra.mxu0 0.0
    %1032 = vmatprep.subr.mxu0 0.0
    %1033 = vmatpush1.xpose.msra.mxu0 0.0
    %1034 = vmatprep.subr.mxu0 0.0
    %1035 = vmatpush1.xpose.msra.mxu0 0.0
    %1036 = vmatprep.subr.mxu0 0.0
    %1037 = vmatpush1.xpose.msra.mxu0 0.0
    %1038 = vmatprep.subr.mxu0 0.0
    %1039 = vmatpush1.xpose.msra.mxu0 0.0
    %1040 = vmatprep.subr.mxu0 0.0
    %1041 = vmatpush1.xpose.msra.mxu0 0.0
    %1042 = vmatprep.subr.mxu0 0.0
    %1043 = vmatpush1.xpose.msra.mxu0 0.0
    %1044 = vmatprep.subr.mxu0 0.0
    %1045 = vmatpush1.xpose.msra.mxu0 0.0
    %1046 = vmatprep.subr.mxu0 0.0
    %1047 = vmatpush1.xpose.msra.mxu0 0.0
    %1048 = vmatprep.subr.mxu0 0.0
    %1049 = vmatpush1.xpose.msra.mxu0 0.0
    %1050 = vmatprep.subr.mxu0 0.0
    %1051 = vmatpush1.xpose.msra.mxu0 0.0
    %1052 = vmatprep.subr.mxu0 0.0
    %1053 = vmatpush1.xpose.msra.mxu0 0.0
    %1054 = vmatprep.subr.mxu0 0.0
    %1055 = vmatpush1.xpose.msra.mxu0 0.0
    %1056 = vmatprep.subr.mxu0 0.0
    %1057 = vmatpush1.xpose.msra.mxu0 0.0
    %1058 = vmatprep.subr.mxu0 0.0
    %1059 = vmatpush1.xpose.msra.mxu0 0.0
    %1060 = vmatprep.subr.mxu0 0.0
    %1061 = vmatpush1.xpose.msra.mxu0 0.0
    %1062 = vmatprep.subr.mxu0 0.0
    %1063 = vmatpush1.xpose.msra.mxu0 0.0
    %1064 = vmatprep.subr.mxu0 0.0
    %1065 = vmatpush1.xpose.msra.mxu0 0.0
    %1066 = vmatprep.subr.mxu0 0.0
    %1067 = vmatpush1.xpose.msra.mxu0 0.0
    %1068 = vmatprep.subr.mxu0 0.0
    %1069 = vmatpush1.xpose.msra.mxu0 0.0
    %1070 = vmatprep.subr.mxu0 0.0
    %1071 = vmatpush1.xpose.msra.mxu0 0.0
    %1072 = vmatprep.mubr.f32.mxu0 0.0
    %1073 = vmatmul.mubr.f32.gmra.mrb[0].mxu0 %v1000
    %v1074 = vpop.f32.mrb[0].mxu0
    %v1075 = vadd.f32 %v35, %v1074
    %v1076 = vpop.f32.mrb[0].mxu0
    %1077 = vmatprep.mubr.f32.mxu0 0.0
    %1078 = vmatmul.mubr.f32.gmra.mrb[0].mxu0 %v1002
    %v1079 = vpop.f32.mrb[0].mxu0
    %v1080 = vadd.f32 %v36, %v1079
    %v1081 = vpop.f32.mrb[0].mxu0
    %1082 = vdwg.mxu0
    %v1083 = vsel %vm233, %v1075, -inf
    %1084 = vmax.xlane.f32.xlu0 %v1083
    %v1085 = vpop.xlane.xlu0 %1084
    %v1086 = vsel %vm233, %v1080, -inf
    %1087 = vmax.xlane.f32.xlu0 %v1086
    %v1088 = vpop.xlane.xlu0 %1087
    %v1089 = vsub.f32 %v1075, %v1085
    %v1090 = vsub.f32 %v1080, %v1088
    %v1091 = vmul.f32 %v1089, 1.442695
    %v1092 = vpow.pop %v1091
    %v1093 = vmul.f32 %v1090, 1.442695
    %v1094 = vpow.pop %v1093
    %v1095 = vsel %vm233, %v1092, 0.0
    %1096 = vadd.xlane.f32.xlu0 %v1095
    %v1097 = vpop.xlane.xlu0 %1096
    %v1098 = vsel %vm233, %v1094, 0.0
    %1099 = vadd.xlane.f32.xlu0 %v1098
    %v1100 = vpop.xlane.xlu0 %1099
    %v1101 = vrcp.pop %v1097
    %v1102 = vrcp.pop %v1100
    %v1103 = vmul.f32 %v1092, %v1101
    %v1104 = vmul.f32 %v1094, %v1102
    %1105 = vrot.lane.b32.xlu0 %v123, 40
    %v1106 = vpop.permute.xlu0 %1105
    %1107 = vrot.lane.b32.xlu0 %v128, 40
    %v1108 = vpop.permute.xlu0 %1107
    %v1112 = vsel %vm233, %v1103, 0
    %v1115 = vsel %vm233, %v1104, 0
    %1117 = vmatprep.subr.mxu0 0.0
    %1118 = vmatpush1.msra.mxu0 %v1106
    %1119 = vmatprep.subr.mxu0 0.0
    %1120 = vmatpush1.msra.mxu0 %v1108
    %1121 = vmatprep.subr.mxu0 0.0
    %1122 = vmatpush1.msra.mxu0 0.0
    %1123 = vmatprep.subr.mxu0 0.0
    %1124 = vmatpush1.msra.mxu0 0.0
    %1125 = vmatprep.subr.mxu0 0.0
    %1126 = vmatpush1.msra.mxu0 0.0
    %1127 = vmatprep.subr.mxu0 0.0
    %1128 = vmatpush1.msra.mxu0 0.0
    %1129 = vmatprep.subr.mxu0 0.0
    %1130 = vmatpush1.msra.mxu0 0.0
    %1131 = vmatprep.subr.mxu0 0.0
    %1132 = vmatpush1.msra.mxu0 0.0
    %1133 = vmatprep.subr.mxu0 0.0
    %1134 = vmatpush1.msra.mxu0 0.0
    %1135 = vmatprep.subr.mxu0 0.0
    %1136 = vmatpush1.msra.mxu0 0.0
    %1137 = vmatprep.subr.mxu0 0.0
    %1138 = vmatpush1.msra.mxu0 0.0
    %1139 = vmatprep.subr.mxu0 0.0
    %1140 = vmatpush1.msra.mxu0 0.0
    %1141 = vmatprep.subr.mxu0 0.0
    %1142 = vmatpush1.msra.mxu0 0.0
    %1143 = vmatprep.subr.mxu0 0.0
    %1144 = vmatpush1.msra.mxu0 0.0
    %1145 = vmatprep.subr.mxu0 0.0
    %1146 = vmatpush1.msra.mxu0 0.0
    %1147 = vmatprep.subr.mxu0 0.0
    %1148 = vmatpush1.msra.mxu0 0.0
    %1149 = vmatprep.subr.mxu0 0.0
    %1150 = vmatpush1.msra.mxu0 0.0
    %1151 = vmatprep.subr.mxu0 0.0
    %1152 = vmatpush1.msra.mxu0 0.0
    %1153 = vmatprep.subr.mxu0 0.0
    %1154 = vmatpush1.msra.mxu0 0.0
    %1155 = vmatprep.subr.mxu0 0.0
    %1156 = vmatpush1.msra.mxu0 0.0
    %1157 = vmatprep.subr.mxu0 0.0
    %1158 = vmatpush1.msra.mxu0 0.0
    %1159 = vmatprep.subr.mxu0 0.0
    %1160 = vmatpush1.msra.mxu0 0.0
    %1161 = vmatprep.subr.mxu0 0.0
    %1162 = vmatpush1.msra.mxu0 0.0
    %1163 = vmatprep.subr.mxu0 0.0
    %1164 = vmatpush1.msra.mxu0 0.0
    %1165 = vmatprep.subr.mxu0 0.0
    %1166 = vmatpush1.msra.mxu0 0.0
    %1167 = vmatprep.subr.mxu0 0.0
    %1168 = vmatpush1.msra.mxu0 0.0
    %1169 = vmatprep.subr.mxu0 0.0
    %1170 = vmatpush1.msra.mxu0 0.0
    %1171 = vmatprep.subr.mxu0 0.0
    %1172 = vmatpush1.msra.mxu0 0.0
    %1173 = vmatprep.subr.mxu0 0.0
    %1174 = vmatpush1.msra.mxu0 0.0
    %1175 = vmatprep.subr.mxu0 0.0
    %1176 = vmatpush1.msra.mxu0 0.0
    %1177 = vmatprep.subr.mxu0 0.0
    %1178 = vmatpush1.msra.mxu0 0.0
    %1179 = vmatprep.subr.mxu0 0.0
    %1180 = vmatpush1.msra.mxu0 0.0
    %1181 = vmatprep.mubr.f32.mxu0 0.0
    %1182 = vmatmul.mubr.f32.gmra.mrb[0].mxu0 %v1112
    %v1183 = vpop.f32.mrb[0].mxu0
    %v1184 = vadd.f32 0.0, %v1183
    %v1185 = vpop.f32.mrb[0].mxu0
    %1186 = vmatprep.mubr.f32.mxu0 0.0
    %1187 = vmatmul.mubr.f32.gmra.mrb[0].mxu0 %v1115
    %v1188 = vpop.f32.mrb[0].mxu0
    %v1189 = vadd.f32 0.0, %v1188
    %v1190 = vpop.f32.mrb[0].mxu0
    %1191 = vdwg.mxu0
    %v1193 = vsel %vm147, %v1184, 0
    %v1196 = vsel %vm147, %v1189, 0
    %1198 = vmatprep.subr.mxu0 0.0
    %1199 = vmatpush1.msra.mxu0 %v134
    %1200 = vmatprep.subr.mxu0 0.0
    %1201 = vmatpush1.msra.mxu0 0.0
    %1202 = vmatprep.subr.mxu0 0.0
    %1203 = vmatpush1.msra.mxu0 0.0
    %1204 = vmatprep.subr.mxu0 0.0
    %1205 = vmatpush1.msra.mxu0 0.0
    %1206 = vmatprep.subr.mxu0 0.0
    %1207 = vmatpush1.msra.mxu0 0.0
    %1208 = vmatprep.subr.mxu0 0.0
    %1209 = vmatpush1.msra.mxu0 0.0
    %1210 = vmatprep.subr.mxu0 0.0
    %1211 = vmatpush1.msra.mxu0 0.0
    %1212 = vmatprep.subr.mxu0 0.0
    %1213 = vmatpush1.msra.mxu0 0.0
    %1214 = vmatprep.subr.mxu0 0.0
    %1215 = vmatpush1.msra.mxu0 0.0
    %1216 = vmatprep.subr.mxu0 0.0
    %1217 = vmatpush1.msra.mxu0 0.0
    %1218 = vmatprep.subr.mxu0 0.0
    %1219 = vmatpush1.msra.mxu0 0.0
    %1220 = vmatprep.subr.mxu0 0.0
    %1221 = vmatpush1.msra.mxu0 0.0
    %1222 = vmatprep.subr.mxu0 0.0
    %1223 = vmatpush1.msra.mxu0 0.0
    %1224 = vmatprep.subr.mxu0 0.0
    %1225 = vmatpush1.msra.mxu0 0.0
    %1226 = vmatprep.subr.mxu0 0.0
    %1227 = vmatpush1.msra.mxu0 0.0
    %1228 = vmatprep.subr.mxu0 0.0
    %1229 = vmatpush1.msra.mxu0 0.0
    %1230 = vmatprep.subr.mxu0 0.0
    %1231 = vmatpush1.msra.mxu0 0.0
    %1232 = vmatprep.subr.mxu0 0.0
    %1233 = vmatpush1.msra.mxu0 0.0
    %1234 = vmatprep.subr.mxu0 0.0
    %1235 = vmatpush1.msra.mxu0 0.0
    %1236 = vmatprep.subr.mxu0 0.0
    %1237 = vmatpush1.msra.mxu0 0.0
    %1238 = vmatprep.subr.mxu0 0.0
    %1239 = vmatpush1.msra.mxu0 0.0
    %1240 = vmatprep.subr.mxu0 0.0
    %1241 = vmatpush1.msra.mxu0 0.0
    %1242 = vmatprep.subr.mxu0 0.0
    %1243 = vmatpush1.msra.mxu0 0.0
    %1244 = vmatprep.subr.mxu0 0.0
    %1245 = vmatpush1.msra.mxu0 0.0
    %1246 = vmatprep.subr.mxu0 0.0
    %1247 = vmatpush1.msra.mxu0 0.0
    %1248 = vmatprep.subr.mxu0 0.0
    %1249 = vmatpush1.msra.mxu0 0.0
    %1250 = vmatprep.subr.mxu0 0.0
    %1251 = vmatpush1.msra.mxu0 0.0
    %1252 = vmatprep.subr.mxu0 0.0
    %1253 = vmatpush1.msra.mxu0 0.0
    %1254 = vmatprep.subr.mxu0 0.0
    %1255 = vmatpush1.msra.mxu0 0.0
    %1256 = vmatprep.subr.mxu0 0.0
    %1257 = vmatpush1.msra.mxu0 0.0
    %1258 = vmatprep.subr.mxu0 0.0
    %1259 = vmatpush1.msra.mxu0 0.0
    %1260 = vmatprep.subr.mxu0 0.0
    %1261 = vmatpush1.msra.mxu0 0.0
    %1262 = vmatprep.mubr.f32.mxu0 0.0
    %1263 = vmatmul.mubr.f32.gmra.mrb[0].mxu0 %v1193
    %v1264 = vpop.f32.mrb[0].mxu0
    %v1265 = vadd.f32 0.0, %v1264
    %v1266 = vpop.f32.mrb[0].mxu0
    %1267 = vmatprep.mubr.f32.mxu0 0.0
    %1268 = vmatmul.mubr.f32.gmra.mrb[0].mxu0 %v1196
    %v1269 = vpop.f32.mrb[0].mxu0
    %v1270 = vadd.f32 0.0, %v1269
    %v1271 = vpop.f32.mrb[0].mxu0
    %1272 = vdwg.mxu0
    %v1273 = vadd.f32 %v990, %v1265
    %v1274 = vadd.f32 %v991, %v1270
    %v1275 = vadd.f32 %v33, %v1273
    %v1276 = vadd.f32 %v34, %v1274
    %v1277 = vsel %vm49, %v1275, 0.0
    %1278 = vadd.xlane.f32.xlu0 %v1277
    %v1279 = vpop.xlane.xlu0 %1278
    %v1280 = vsel %vm49, %v1276, 0.0
    %1281 = vadd.xlane.f32.xlu0 %v1280
    %v1282 = vpop.xlane.xlu0 %1281
    %v1283 = vrcp.pop 32.0
    %v1284 = vmul.f32 %v1279, %v1283
    %v1285 = vmul.f32 %v1282, %v1283
    %v1286 = vsub.f32 %v1275, %v1284
    %v1287 = vsub.f32 %v1276, %v1285
    %v1288 = vmul.f32 %v1286, %v1286
    %v1289 = vmul.f32 %v1287, %v1287
    %v1290 = vsel %vm49, %v1288, 0.0
    %1291 = vadd.xlane.f32.xlu0 %v1290
    %v1292 = vpop.xlane.xlu0 %1291
    %v1293 = vsel %vm49, %v1289, 0.0
    %1294 = vadd.xlane.f32.xlu0 %v1293
    %v1295 = vpop.xlane.xlu0 %1294
    %v1296 = vmul.f32 %v1292, 0.032258064
    %v1297 = vmul.f32 %v1295, 0.032258064
    %v1298 = vrsqrt.pop %v1296
    %v1299 = vmul.f32 %v1296, %v1298
    %vm1300 = vcmp.eq.f32.partialorder %v1296, inf
    %v1301 = vsel %vm1300, %v1296, %v1299
    %vm1302 = vcmp.eq.f32.partialorder %v1296, 0.0
    %v1303 = vand.u32 %v1296, 2147483648
    %v1304 = vsel %vm1302, %v1303, %v1301
    %v1305 = vrsqrt.pop %v1297
    %v1306 = vmul.f32 %v1297, %v1305
    %vm1307 = vcmp.eq.f32.partialorder %v1297, inf
    %v1308 = vsel %vm1307, %v1297, %v1306
    %vm1309 = vcmp.eq.f32.partialorder %v1297, 0.0
    %v1310 = vand.u32 %v1297, 2147483648
    %v1311 = vsel %vm1309, %v1310, %v1308
    %v1312 = vadd.f32 %v1304, 1e-06
    %v1313 = vadd.f32 %v1311, 1e-06
    %v1314 = vrcp.pop %v1312
    %v1315 = vrcp.pop %v1313
    %v1316 = vlaneseq
    %v1317 = vshrl.u32 %v1316, 7
    %v1318 = vsub.s32 1, %v1317
    %v1319 = vrot.slane %v37, %v1318
    %v1320 = vmul.f32 %v1319, %v1286
    %v1321 = vmul.f32 %v1319, %v1287
    %v1322 = vmul.f32 %v1320, %v1314
    %v1323 = vmul.f32 %v1321, %v1315
    %v1324 = vlaneseq
    %v1325 = vshrl.u32 %v1324, 7
    %v1326 = vsub.s32 2, %v1325
    %v1327 = vrot.slane %v37, %v1326
    %v1328 = vadd.f32 %v1322, %v1327
    %v1329 = vadd.f32 %v1323, %v1327
    %v1330 = vld [vmem:[%s5] sm:$0xff]
    %v1331 = vld [vmem:[%s5 + $0x8] sm:$0xff]
    %v1332 = vld [vmem:[%s5 + $0x10] sm:$0xff]
    %v1333 = vld [vmem:[%s5 + $0x18] sm:$0xff]
    %v1334 = vld [vmem:[%s6] sm:$0x1]
    %v1336 = vlaneseq
    %v1337 = vshrl.u32 %v1336, 7
    %v1338 = vsub.s32 0, %v1337
    %v1339 = vrot.slane %v1334, %v1338
    %v1342 = vsel %vm49, %v1328, 0
    %v1345 = vsel %vm49, %v1329, 0
    %1347 = vmatprep.subr.mxu0 0.0
    %1348 = vmatpush1.msra.mxu0 %v1330
    %1349 = vmatprep.subr.mxu0 0.0
    %1350 = vmatpush1.msra.mxu0 %v1331
    %1351 = vmatprep.subr.mxu0 0.0
    %1352 = vmatpush1.msra.mxu0 %v1332
    %1353 = vmatprep.subr.mxu0 0.0
    %1354 = vmatpush1.msra.mxu0 %v1333
    %1355 = vmatprep.subr.mxu0 0.0
    %1356 = vmatpush1.msra.mxu0 0.0
    %1357 = vmatprep.subr.mxu0 0.0
    %1358 = vmatpush1.msra.mxu0 0.0
    %1359 = vmatprep.subr.mxu0 0.0
    %1360 = vmatpush1.msra.mxu0 0.0
    %1361 = vmatprep.subr.mxu0 0.0
    %1362 = vmatpush1.msra.mxu0 0.0
    %1363 = vmatprep.subr.mxu0 0.0
    %1364 = vmatpush1.msra.mxu0 0.0
    %1365 = vmatprep.subr.mxu0 0.0
    %1366 = vmatpush1.msra.mxu0 0.0
    %1367 = vmatprep.subr.mxu0 0.0
    %1368 = vmatpush1.msra.mxu0 0.0
    %1369 = vmatprep.subr.mxu0 0.0
    %1370 = vmatpush1.msra.mxu0 0.0
    %1371 = vmatprep.subr.mxu0 0.0
    %1372 = vmatpush1.msra.mxu0 0.0
    %1373 = vmatprep.subr.mxu0 0.0
    %1374 = vmatpush1.msra.mxu0 0.0
    %1375 = vmatprep.subr.mxu0 0.0
    %1376 = vmatpush1.msra.mxu0 0.0
    %1377 = vmatprep.subr.mxu0 0.0
    %1378 = vmatpush1.msra.mxu0 0.0
    %1379 = vmatprep.subr.mxu0 0.0
    %1380 = vmatpush1.msra.mxu0 0.0
    %1381 = vmatprep.subr.mxu0 0.0
    %1382 = vmatpush1.msra.mxu0 0.0
    %1383 = vmatprep.subr.mxu0 0.0
    %1384 = vmatpush1.msra.mxu0 0.0
    %1385 = vmatprep.subr.mxu0 0.0
    %1386 = vmatpush1.msra.mxu0 0.0
    %1387 = vmatprep.subr.mxu0 0.0
    %1388 = vmatpush1.msra.mxu0 0.0
    %1389 = vmatprep.subr.mxu0 0.0
    %1390 = vmatpush1.msra.mxu0 0.0
    %1391 = vmatprep.subr.mxu0 0.0
    %1392 = vmatpush1.msra.mxu0 0.0
    %1393 = vmatprep.subr.mxu0 0.0
    %1394 = vmatpush1.msra.mxu0 0.0
    %1395 = vmatprep.subr.mxu0 0.0
    %1396 = vmatpush1.msra.mxu0 0.0
    %1397 = vmatprep.subr.mxu0 0.0
    %1398 = vmatpush1.msra.mxu0 0.0
    %1399 = vmatprep.subr.mxu0 0.0
    %1400 = vmatpush1.msra.mxu0 0.0
    %1401 = vmatprep.subr.mxu0 0.0
    %1402 = vmatpush1.msra.mxu0 0.0
    %1403 = vmatprep.subr.mxu0 0.0
    %1404 = vmatpush1.msra.mxu0 0.0
    %1405 = vmatprep.subr.mxu0 0.0
    %1406 = vmatpush1.msra.mxu0 0.0
    %1407 = vmatprep.subr.mxu0 0.0
    %1408 = vmatpush1.msra.mxu0 0.0
    %1409 = vmatprep.subr.mxu0 0.0
    %1410 = vmatpush1.msra.mxu0 0.0
    %1411 = vmatprep.mubr.f32.mxu0 0.0
    %1412 = vmatmul.mubr.f32.gmra.mrb[0].mxu0 %v1342
    %v1413 = vpop.f32.mrb[0].mxu0
    %v1414 = vadd.f32 %v1339, %v1413
    %v1415 = vpop.f32.mrb[0].mxu0
    %1416 = vmatprep.mubr.f32.mxu0 0.0
    %1417 = vmatmul.mubr.f32.gmra.mrb[0].mxu0 %v1345
    %v1418 = vpop.f32.mrb[0].mxu0
    %v1419 = vadd.f32 %v1339, %v1418
    %v1420 = vpop.f32.mrb[0].mxu0
    %1421 = vdwg.mxu0
    %v1422 = vmul.f32 %v1414, 0.044715
    %v1423 = vmul.f32 %v1419, 0.044715
    %v1424 = vmul.f32 %v1422, %v1414
    %v1425 = vmul.f32 %v1423, %v1419
    %v1426 = vmul.f32 %v1424, %v1414
    %v1427 = vmul.f32 %v1425, %v1419
    %v1428 = vadd.f32 %v1414, %v1426
    %v1429 = vadd.f32 %v1419, %v1427
    %v1430 = vmul.f32 %v1428, 0.7978846
    %v1431 = vmul.f32 %v1429, 0.7978846
    %v1432 = vtanh.pop %v1430
    %v1433 = vtanh.pop %v1431
    %v1434 = vadd.f32 %v1432, 1.0
    %v1435 = vadd.f32 %v1433, 1.0
    %v1436 = vmul.f32 %v1434, 0.5
    %v1437 = vmul.f32 %v1435, 0.5
    %v1438 = vmul.f32 %v1414, %v1436
    %v1439 = vmul.f32 %v1419, %v1437
    %v1440 = vld [vmem:[%s7] sm:$0xff]
    %v1441 = vld [vmem:[%s7 + $0x8] sm:$0xff]
    %v1442 = vld [vmem:[%s7 + $0x10] sm:$0xff]
    %v1443 = vld [vmem:[%s7 + $0x18] sm:$0xff]
    %v1444 = vld [vmem:[%s7 + $0x20] sm:$0xff]
    %v1445 = vld [vmem:[%s7 + $0x28] sm:$0xff]
    %v1446 = vld [vmem:[%s7 + $0x30] sm:$0xff]
    %v1447 = vld [vmem:[%s7 + $0x38] sm:$0xff]
    %v1448 = vlaneseq
    %v1449 = vshrl.u32 %v1448, 7
    %v1450 = vsub.s32 3, %v1449
    %v1451 = vrot.slane %v37, %v1450
    %vm1452 = vcmask 523264
    %v1454 = vsel %vm1452, %v1438, 0
    %v1457 = vsel %vm1452, %v1439, 0
    %1459 = vmatprep.subr.mxu0 0.0
    %1460 = vmatpush1.msra.mxu0 %v1440
    %1461 = vmatprep.subr.mxu0 0.0
    %1462 = vmatpush1.msra.mxu0 %v1441
    %1463 = vmatprep.subr.mxu0 0.0
    %1464 = vmatpush1.msra.mxu0 %v1442
    %1465 = vmatprep.subr.mxu0 0.0
    %1466 = vmatpush1.msra.mxu0 %v1443
    %1467 = vmatprep.subr.mxu0 0.0
    %1468 = vmatpush1.msra.mxu0 %v1444
    %1469 = vmatprep.subr.mxu0 0.0
    %1470 = vmatpush1.msra.mxu0 %v1445
    %1471 = vmatprep.subr.mxu0 0.0
    %1472 = vmatpush1.msra.mxu0 %v1446
    %1473 = vmatprep.subr.mxu0 0.0
    %1474 = vmatpush1.msra.mxu0 %v1447
    %1475 = vmatprep.subr.mxu0 0.0
    %1476 = vmatpush1.msra.mxu0 0.0
    %1477 = vmatprep.subr.mxu0 0.0
    %1478 = vmatpush1.msra.mxu0 0.0
    %1479 = vmatprep.subr.mxu0 0.0
    %1480 = vmatpush1.msra.mxu0 0.0
    %1481 = vmatprep.subr.mxu0 0.0
    %1482 = vmatpush1.msra.mxu0 0.0
    %1483 = vmatprep.subr.mxu0 0.0
    %1484 = vmatpush1.msra.mxu0 0.0
    %1485 = vmatprep.subr.mxu0 0.0
    %1486 = vmatpush1.msra.mxu0 0.0
    %1487 = vmatprep.subr.mxu0 0.0
    %1488 = vmatpush1.msra.mxu0 0.0
    %1489 = vmatprep.subr.mxu0 0.0
    %1490 = vmatpush1.msra.mxu0 0.0
    %1491 = vmatprep.subr.mxu0 0.0
    %1492 = vmatpush1.msra.mxu0 0.0
    %1493 = vmatprep.subr.mxu0 0.0
    %1494 = vmatpush1.msra.mxu0 0.0
    %1495 = vmatprep.subr.mxu0 0.0
    %1496 = vmatpush1.msra.mxu0 0.0
    %1497 = vmatprep.subr.mxu0 0.0
    %1498 = vmatpush1.msra.mxu0 0.0
    %1499 = vmatprep.subr.mxu0 0.0
    %1500 = vmatpush1.msra.mxu0 0.0
    %1501 = vmatprep.subr.mxu0 0.0
    %1502 = vmatpush1.msra.mxu0 0.0
    %1503 = vmatprep.subr.mxu0 0.0
    %1504 = vmatpush1.msra.mxu0 0.0
    %1505 = vmatprep.subr.mxu0 0.0
    %1506 = vmatpush1.msra.mxu0 0.0
    %1507 = vmatprep.subr.mxu0 0.0
    %1508 = vmatpush1.msra.mxu0 0.0
    %1509 = vmatprep.subr.mxu0 0.0
    %1510 = vmatpush1.msra.mxu0 0.0
    %1511 = vmatprep.subr.mxu0 0.0
    %1512 = vmatpush1.msra.mxu0 0.0
    %1513 = vmatprep.subr.mxu0 0.0
    %1514 = vmatpush1.msra.mxu0 0.0
    %1515 = vmatprep.subr.mxu0 0.0
    %1516 = vmatpush1.msra.mxu0 0.0
    %1517 = vmatprep.subr.mxu0 0.0
    %1518 = vmatpush1.msra.mxu0 0.0
    %1519 = vmatprep.subr.mxu0 0.0
    %1520 = vmatpush1.msra.mxu0 0.0
    %1521 = vmatprep.subr.mxu0 0.0
    %1522 = vmatpush1.msra.mxu0 0.0
    %1523 = vmatprep.mubr.f32.mxu0 0.0
    %1524 = vmatmul.mubr.f32.gmra.mrb[0].mxu0 %v1454
    %v1525 = vpop.f32.mrb[0].mxu0
    %v1526 = vadd.f32 %v1451, %v1525
    %v1527 = vpop.f32.mrb[0].mxu0
    %1528 = vmatprep.mubr.f32.mxu0 0.0
    %1529 = vmatmul.mubr.f32.gmra.mrb[0].mxu0 %v1457
    %v1530 = vpop.f32.mrb[0].mxu0
    %v1531 = vadd.f32 %v1451, %v1530
    %v1532 = vpop.f32.mrb[0].mxu0
    %1533 = vdwg.mxu0
    %v1534 = vadd.f32 %v1328, %v1526
    %v1535 = vadd.f32 %v1329, %v1531
    %v1536 = vsel %vm49, %v1534, 0.0
    %1537 = vadd.xlane.f32.xlu0 %v1536
    %v1538 = vpop.xlane.xlu0 %1537
    %v1539 = vsel %vm49, %v1535, 0.0
    %1540 = vadd.xlane.f32.xlu0 %v1539
    %v1541 = vpop.xlane.xlu0 %1540
    %v1542 = vmul.f32 %v1538, %v1283
    %v1543 = vmul.f32 %v1541, %v1283
    %v1544 = vsub.f32 %v1534, %v1542
    %v1545 = vsub.f32 %v1535, %v1543
    %v1546 = vmul.f32 %v1544, %v1544
    %v1547 = vmul.f32 %v1545, %v1545
    %v1548 = vsel %vm49, %v1546, 0.0
    %1549 = vadd.xlane.f32.xlu0 %v1548
    %v1550 = vpop.xlane.xlu0 %1549
    %v1551 = vsel %vm49, %v1547, 0.0
    %1552 = vadd.xlane.f32.xlu0 %v1551
    %v1553 = vpop.xlane.xlu0 %1552
    %v1554 = vmul.f32 %v1550, 0.032258064
    %v1555 = vmul.f32 %v1553, 0.032258064
    %v1556 = vrsqrt.pop %v1554
    %v1557 = vmul.f32 %v1554, %v1556
    %vm1558 = vcmp.eq.f32.partialorder %v1554, inf
    %v1559 = vsel %vm1558, %v1554, %v1557
    %vm1560 = vcmp.eq.f32.partialorder %v1554, 0.0
    %v1561 = vand.u32 %v1554, 2147483648
    %v1562 = vsel %vm1560, %v1561, %v1559
    %v1563 = vrsqrt.pop %v1555
    %v1564 = vmul.f32 %v1555, %v1563
    %vm1565 = vcmp.eq.f32.partialorder %v1555, inf
    %v1566 = vsel %vm1565, %v1555, %v1564
    %vm1567 = vcmp.eq.f32.partialorder %v1555, 0.0
    %v1568 = vand.u32 %v1555, 2147483648
    %v1569 = vsel %vm1567, %v1568, %v1566
    %v1570 = vadd.f32 %v1562, 1e-06
    %v1571 = vadd.f32 %v1569, 1e-06
    %v1572 = vrcp.pop %v1570
    %v1573 = vrcp.pop %v1571
    %v1574 = vlaneseq
    %v1575 = vshrl.u32 %v1574, 7
    %v1576 = vsub.s32 4, %v1575
    %v1577 = vrot.slane %v37, %v1576
    %v1578 = vmul.f32 %v1577, %v1544
    %v1579 = vmul.f32 %v1577, %v1545
    %v1580 = vmul.f32 %v1578, %v1572
    %v1581 = vmul.f32 %v1579, %v1573
    %v1582 = vlaneseq
    %v1583 = vshrl.u32 %v1582, 7
    %v1584 = vsub.s32 5, %v1583
    %v1585 = vrot.slane %v37, %v1584
    %v1586 = vadd.f32 %v1580, %v1585
    %v1587 = vadd.f32 %v1581, %v1585
    %1588 = vst.msk [vmem:[#allocation2] sm:$0xff] %vm49, %v1586
    %1589 = vst.msk [vmem:[#allocation2 + $0x8] sm:$0xff] %vm49, %v1587
    // Predicated region
    $region38: #{encoder_layer.1} parent=1 // pred_check
      _
    $region39: #{encoder_layer.1} parent=1 // pred_check_branch
      %1591 = sbr.rel (0) target = $region41
    $region40: #{encoder_layer.1} parent=1 // pred_region
      %s1593 = ssub.s32 256, 256
      %1594 = vsyncadd [#allocation3], %s1593
      %s1595 = sshll.u32 [#allocation2], 4
      %s1596 = int_to_ptr.vmem [resolvable:$true] %s1595
      %1601 = dma.vmem_to_hbm [thread:$0]  %s1596, 256, %s9, [#allocation3], 128, 128, 8
    $region41: #{encoder_layer.1} parent=1 // pred_fallthru
      _
    // Predicated region
    $region42: #{encoder_layer.1} parent=1 // pred_check
      _
    $region43: #{encoder_layer.1} parent=1 // pred_check_branch
      %1603 = sbr.rel (0) target = $region45
    $region44: #{encoder_layer.1} parent=1 // pred_region
      %1604 = dma.done [#allocation3], 256
    $region45: #{encoder_layer.1} parent=1 // pred_fallthru
      _
    %1605 = vsyncpa [#allocation3], 1

</llo_original>
